<compile_context>
chip_gen: v7x
topology: tpu7x:2x2x1
jax: 0.10.0
libtpu: 0.0.40
codegen_flags: <defaults>
</compile_context>

<pallas_src>
import functools

import jax
import jax.numpy as jnp
from jax.experimental import pallas as pl
from jax.experimental.pallas import tpu as pltpu


def _lstm_tagger_kernel(ids_ref, emb_ref, wih_ref, whh_ref, b_ref, wt_ref,
                        bt_ref, out_ref, xg_ref, hs_ref, *, hidden, hidden_pad):
    """Fused embedding gather + LSTM recurrence + hidden2tag + log_softmax.

    ids_ref: (S,)  int32 token ids (SMEM)
    emb_ref: (V, E)       embedding table
    wih_ref: (E, 4*Hp)    W_ih^T, gate order (i, f, o, g), H zero-padded to Hp
    whh_ref: (H, 4*Hp)    W_hh^T, compact rows (no zero-row padding), same cols
    b_ref:   (1, 4*Hp)    b_ih + b_hh, same ordering / padding
    wt_ref:  (Hp, Tp)     hidden2tag weight^T, zero-padded rows and columns
    bt_ref:  (1, Tp)      hidden2tag bias, padded lanes = -1e30
    out_ref: (S, Tp)      log-softmax tag scores (lane-dense; slice [:, :T] outside)
    xg_ref:  (S, 4*Hp)    VMEM scratch: per-step input gate contributions
    hs_ref:  (S, Hp)      VMEM scratch: per-step hidden states
    """
    H = hidden
    Hp = hidden_pad
    S = out_ref.shape[0]

    # Fused embedding gather: S static-unrolled dynamic-start row slices.
    x = jnp.concatenate(
        [emb_ref[pl.ds(ids_ref[t], 1), :] for t in range(S)], axis=0)  # (S, E)

    # Input contribution of every timestep in one matmul, staged to VMEM so the
    # serial loop only reads one (1, 4*Hp) row per step.
    xg_ref[...] = (
        jnp.dot(x, wih_ref[...], preferred_element_type=jnp.float32)
        + b_ref[...]
    )

    # h_0 = c_0 = 0 (PyTorch default when no initial state is passed).
    h = jnp.zeros((1, Hp), jnp.float32)
    c = jnp.zeros((1, Hp), jnp.float32)
    for t in range(S):  # fully unrolled, S static
        # W_hh is compact (H rows); padded lanes of h are exactly 0, so
        # contracting only h[:, :H] is numerically identical.
        gates = xg_ref[pl.ds(t, 1), :] + jnp.dot(
            h[:, :H], whh_ref[...], preferred_element_type=jnp.float32
        )  # (1, 4*Hp)
        # Gate order (i, f, o, g): slices land on 128-lane vreg boundaries.
        # sigmoid(x) = 0.5*(tanh(0.5*x)+1): one EUP push for i/f/o.
        ifo = 0.5 * (jnp.tanh(0.5 * gates[:, 0:3 * Hp]) + 1.0)
        g_g = jnp.tanh(gates[:, 3 * Hp:4 * Hp])
        i_g = ifo[:, 0 * Hp:1 * Hp]
        f_g = ifo[:, 1 * Hp:2 * Hp]
        o_g = ifo[:, 2 * Hp:3 * Hp]
        c = f_g * c + i_g * g_g
        h = o_g * jnp.tanh(c)
        hs_ref[pl.ds(t, 1), :] = h

    # hidden2tag (lane-dense padded tag dim) + log_softmax over dim=1.
    tag = (
        jnp.dot(hs_ref[...], wt_ref[...], preferred_element_type=jnp.float32)
        + bt_ref[...]
    )  # (S, Tp); padded tag lanes sit at -1e30 and vanish under exp().
    m = jnp.max(tag, axis=1, keepdims=True)
    z = tag - m
    out_ref[...] = z - jnp.log(jnp.sum(jnp.exp(z), axis=1, keepdims=True))


def prepare_params(w_ih, w_hh, b_ih, b_hh, w_tag, b_tag,
                   hidden_pad=128, tag_pad=128):
    """One-time weight prep (outside the per-call path).

    Transposes weights, reorders gate blocks from PyTorch's (i, f, g, o) to
    (i, f, o, g), zero-pads the hidden dim H -> Hp so each gate is a full
    128-lane vreg, keeps W_hh compact along its row (contraction) dim so no
    structural zeros are shipped from HBM, and pads the tag dim T -> Tp for a
    lane-dense output store (padded bias lanes = -1e30 so log_softmax is
    unchanged on the real lanes).
    """
    H = w_hh.shape[1]
    T = w_tag.shape[0]
    Hp = max(hidden_pad, H)
    Tp = max(tag_pad, T)

    def reorder(mat_or_vec):
        i, f, g, o = jnp.split(mat_or_vec, 4, axis=0)
        return [i, f, o, g]

    # W_ih: (4H, E) -> blocks (H, E) -> transpose (E, H) -> pad cols -> (E, 4Hp)
    wih_t = jnp.concatenate(
        [jnp.pad(blk.T, ((0, 0), (0, Hp - H))) for blk in reorder(w_ih)], axis=1
    )
    # W_hh compact: (4H, H) -> blocks (H, H) -> transpose -> pad cols only
    # -> (H, 4Hp).  No zero rows are shipped from HBM.
    whh_t = jnp.concatenate(
        [jnp.pad(blk.T, ((0, 0), (0, Hp - H))) for blk in reorder(w_hh)], axis=1
    )
    # Combined bias, reordered and padded: (1, 4Hp).
    b = jnp.concatenate(
        [jnp.pad(bb, (0, Hp - H)) for bb in reorder(b_ih + b_hh)]
    ).reshape(1, 4 * Hp)
    # hidden2tag: (T, H) -> (Hp, Tp); zero-padded rows and columns.
    wt_t = jnp.pad(w_tag.T, ((0, Hp - H), (0, Tp - T)))
    # Bias: padded tag lanes get a large negative so max/logsumexp ignore them.
    bt = jnp.concatenate(
        [b_tag.astype(jnp.float32), jnp.full((Tp - T,), -1e30, jnp.float32)]
    ).reshape(1, Tp)
    return wih_t, whh_t, b, wt_t, bt


def lstm_tagger_pallas(sentence, emb_w, wih_t, whh_t, b, wt_t, bt, num_tags):
    """sentence: (S,) int32 token ids; remaining weights from prepare_params()."""
    S = sentence.shape[0]
    H = whh_t.shape[0]
    Hp = whh_t.shape[1] // 4
    Tp = wt_t.shape[1]

    kernel = functools.partial(_lstm_tagger_kernel, hidden=H, hidden_pad=Hp)
    vmem = pl.BlockSpec(memory_space=pltpu.MemorySpace.VMEM)
    smem = pl.BlockSpec(memory_space=pltpu.MemorySpace.SMEM)
    out_padded = pl.pallas_call(
        kernel,
        out_shape=jax.ShapeDtypeStruct((S, Tp), jnp.float32),
        in_specs=[smem, vmem, vmem, vmem, vmem, vmem, vmem],
        out_specs=vmem,
        scratch_shapes=[
            pltpu.VMEM((S, 4 * Hp), jnp.float32),  # xg
            pltpu.VMEM((S, Hp), jnp.float32),      # hidden states
        ],
    )(sentence, emb_w, wih_t, whh_t, b, wt_t, bt)
    return out_padded[:, :num_tags]


def lstm_tagger_ref(sentence, emb_w, w_ih, w_hh, b_ih, b_hh, w_tag, b_tag):
    """Pure-JAX reference matching torch semantics (gate order i, f, g, o)."""
    x = emb_w[sentence]  # (S, E)
    H = w_hh.shape[1]

    def step(carry, x_t):
        h, c = carry
        gates = x_t @ w_ih.T + b_ih + h @ w_hh.T + b_hh
        i_g = jax.nn.sigmoid(gates[0 * H:1 * H])
        f_g = jax.nn.sigmoid(gates[1 * H:2 * H])
        g_g = jnp.tanh(gates[2 * H:3 * H])
        o_g = jax.nn.sigmoid(gates[3 * H:4 * H])
        c = f_g * c + i_g * g_g
        h = o_g * jnp.tanh(c)
        return (h, c), h

    init = (jnp.zeros((H,), jnp.float32), jnp.zeros((H,), jnp.float32))
    _, hs = jax.lax.scan(step, init, x)
    tag = hs @ w_tag.T + b_tag
    return jax.nn.log_softmax(tag, axis=1)


if __name__ == "__main__":
    # Small, deterministic problem sizes consistent with the module's forward.
    VOCAB = 20      # num_embeddings
    EMB = 32        # embedding_dim
    HID = 32        # hidden_dim
    TAGS = 8        # tagset_size
    SEQ = 8         # len(sentence)

    key = jax.random.PRNGKey(0)
    keys = jax.random.split(key, 8)

    # Parameters (PyTorch-style uniform(-1/sqrt(H), 1/sqrt(H)) init, deterministic).
    s = 1.0 / jnp.sqrt(jnp.float32(HID))
    emb_w = jax.random.normal(keys[0], (VOCAB, EMB), jnp.float32)  # frozen embedding
    w_ih = jax.random.uniform(keys[1], (4 * HID, EMB), jnp.float32, -s, s)
    w_hh = jax.random.uniform(keys[2], (4 * HID, HID), jnp.float32, -s, s)
    b_ih = jax.random.uniform(keys[3], (4 * HID,), jnp.float32, -s, s)
    b_hh = jax.random.uniform(keys[4], (4 * HID,), jnp.float32, -s, s)
    w_tag = jax.random.uniform(keys[5], (TAGS, HID), jnp.float32, -s, s)
    b_tag = jax.random.uniform(keys[6], (TAGS,), jnp.float32, -s, s)

    sentence = jax.random.randint(keys[7], (SEQ,), 0, VOCAB, jnp.int32)

    # One-time weight prep (kept out of the per-call path).
    wih_t, whh_t, b, wt_t, bt = prepare_params(
        w_ih, w_hh, b_ih, b_hh, w_tag, b_tag, hidden_pad=128, tag_pad=128
    )

    out = lstm_tagger_pallas(sentence, emb_w, wih_t, whh_t, b, wt_t, bt, TAGS)
    out = jax.block_until_ready(out)

    ref = lstm_tagger_ref(sentence, emb_w, w_ih, w_hh, b_ih, b_hh, w_tag, b_tag)
    assert out.shape == (SEQ, TAGS)
    assert jnp.allclose(out, ref, atol=1e-4, rtol=1e-4), "mismatch vs JAX reference"

    print("KERNEL_OK")
</pallas_src>

<mosaic_0001>
module attributes {stable_mosaic.version = 11 : i64} {
  func.func @_lstm_tagger_kernel(%arg0: memref<8xi32, #tpu.memory_space<smem>>, %arg1: memref<20x32xf32, #tpu.memory_space<vmem>>, %arg2: memref<32x512xf32, #tpu.memory_space<vmem>>, %arg3: memref<32x512xf32, #tpu.memory_space<vmem>>, %arg4: memref<1x512xf32, #tpu.memory_space<vmem>>, %arg5: memref<128x128xf32, #tpu.memory_space<vmem>>, %arg6: memref<1x128xf32, #tpu.memory_space<vmem>>, %arg7: memref<8x128xf32, #tpu.memory_space<vmem>>, %arg8: memref<8x512xf32, #tpu.memory_space<vmem>>, %arg9: memref<8x128xf32, #tpu.memory_space<vmem>>) attributes {dimension_semantics = [], scalar_prefetch = 0 : i64, scratch_operands = 2 : i64, tpu.core_type = #tpu.core_type<tc>} {
    %c0 = arith.constant 0 : index
    %0 = memref.load %arg0[%c0] : memref<8xi32, #tpu.memory_space<smem>>
    %1 = arith.index_cast %0 : i32 to index
    %c0_0 = arith.constant 0 : index
    %2 = vector.load %arg1[%1, %c0_0] : memref<20x32xf32, #tpu.memory_space<vmem>>, vector<1x32xf32>
    %c1 = arith.constant 1 : index
    %3 = memref.load %arg0[%c1] : memref<8xi32, #tpu.memory_space<smem>>
    %4 = arith.index_cast %3 : i32 to index
    %c0_1 = arith.constant 0 : index
    %5 = vector.load %arg1[%4, %c0_1] : memref<20x32xf32, #tpu.memory_space<vmem>>, vector<1x32xf32>
    %c2 = arith.constant 2 : index
    %6 = memref.load %arg0[%c2] : memref<8xi32, #tpu.memory_space<smem>>
    %7 = arith.index_cast %6 : i32 to index
    %c0_2 = arith.constant 0 : index
    %8 = vector.load %arg1[%7, %c0_2] : memref<20x32xf32, #tpu.memory_space<vmem>>, vector<1x32xf32>
    %c3 = arith.constant 3 : index
    %9 = memref.load %arg0[%c3] : memref<8xi32, #tpu.memory_space<smem>>
    %10 = arith.index_cast %9 : i32 to index
    %c0_3 = arith.constant 0 : index
    %11 = vector.load %arg1[%10, %c0_3] : memref<20x32xf32, #tpu.memory_space<vmem>>, vector<1x32xf32>
    %c4 = arith.constant 4 : index
    %12 = memref.load %arg0[%c4] : memref<8xi32, #tpu.memory_space<smem>>
    %13 = arith.index_cast %12 : i32 to index
    %c0_4 = arith.constant 0 : index
    %14 = vector.load %arg1[%13, %c0_4] : memref<20x32xf32, #tpu.memory_space<vmem>>, vector<1x32xf32>
    %c5 = arith.constant 5 : index
    %15 = memref.load %arg0[%c5] : memref<8xi32, #tpu.memory_space<smem>>
    %16 = arith.index_cast %15 : i32 to index
    %c0_5 = arith.constant 0 : index
    %17 = vector.load %arg1[%16, %c0_5] : memref<20x32xf32, #tpu.memory_space<vmem>>, vector<1x32xf32>
    %c6 = arith.constant 6 : index
    %18 = memref.load %arg0[%c6] : memref<8xi32, #tpu.memory_space<smem>>
    %19 = arith.index_cast %18 : i32 to index
    %c0_6 = arith.constant 0 : index
    %20 = vector.load %arg1[%19, %c0_6] : memref<20x32xf32, #tpu.memory_space<vmem>>, vector<1x32xf32>
    %c7 = arith.constant 7 : index
    %21 = memref.load %arg0[%c7] : memref<8xi32, #tpu.memory_space<smem>>
    %22 = arith.index_cast %21 : i32 to index
    %c0_7 = arith.constant 0 : index
    %23 = vector.load %arg1[%22, %c0_7] : memref<20x32xf32, #tpu.memory_space<vmem>>, vector<1x32xf32>
    %24 = tpu.concatenate %2, %5, %8, %11, %14, %17, %20, %23 in 0 : vector<1x32xf32>, vector<1x32xf32>, vector<1x32xf32>, vector<1x32xf32>, vector<1x32xf32>, vector<1x32xf32>, vector<1x32xf32>, vector<1x32xf32> -> vector<8x32xf32>
    %c0_8 = arith.constant 0 : index
    %c0_9 = arith.constant 0 : index
    %25 = vector.load %arg2[%c0_8, %c0_9] : memref<32x512xf32, #tpu.memory_space<vmem>>, vector<32x512xf32>
    %cst = arith.constant dense<0.000000e+00> : vector<8x512xf32>
    %26 = tpu.matmul %24, %25, %cst {dimension_numbers = #tpu.dot_dimension_numbers<[1], [0], [0], [1], [0, 0, 1, 1], [], []>} : vector<8x32xf32>, vector<32x512xf32>, vector<8x512xf32> -> vector<8x512xf32>
    %c0_10 = arith.constant 0 : index
    %c0_11 = arith.constant 0 : index
    %27 = vector.load %arg4[%c0_10, %c0_11] : memref<1x512xf32, #tpu.memory_space<vmem>>, vector<1x512xf32>
    %28 = vector.broadcast %27 : vector<1x512xf32> to vector<8x512xf32>
    %29 = arith.addf %26, %28 : vector<8x512xf32>
    %c0_12 = arith.constant 0 : index
    %c0_13 = arith.constant 0 : index
    %30 = vector.load %arg8[%c0_12, %c0_13] : memref<8x512xf32, #tpu.memory_space<vmem>>, vector<8x512xf32>
    tpu.vector_store %arg8[%c0_12, %c0_13], %29 {strides = array<i32>} : memref<8x512xf32, #tpu.memory_space<vmem>>, vector<8x512xf32>,
    %cst_14 = arith.constant 0.000000e+00 : f32
    %31 = vector.broadcast %cst_14 : f32 to vector<1x128xf32>
    %cst_15 = arith.constant 0.000000e+00 : f32
    %32 = vector.broadcast %cst_15 : f32 to vector<1x128xf32>
    %c0_16 = arith.constant 0 : index
    %c0_17 = arith.constant 0 : index
    %33 = vector.load %arg8[%c0_16, %c0_17] : memref<8x512xf32, #tpu.memory_space<vmem>>, vector<1x512xf32>
    %34 = vector.extract_strided_slice %31 {offsets = [0, 0], sizes = [1, 32], strides = [1, 1]} : vector<1x128xf32> to vector<1x32xf32>
    %c0_18 = arith.constant 0 : index
    %c0_19 = arith.constant 0 : index
    %35 = vector.load %arg3[%c0_18, %c0_19] : memref<32x512xf32, #tpu.memory_space<vmem>>, vector<32x512xf32>
    %cst_20 = arith.constant dense<0.000000e+00> : vector<1x512xf32>
    %36 = tpu.matmul %34, %35, %cst_20 {dimension_numbers = #tpu.dot_dimension_numbers<[1], [0], [0], [1], [0, 0, 1, 1], [], []>} : vector<1x32xf32>, vector<32x512xf32>, vector<1x512xf32> -> vector<1x512xf32>
    %37 = arith.addf %33, %36 : vector<1x512xf32>
    %38 = vector.extract_strided_slice %37 {offsets = [0, 0], sizes = [1, 384], strides = [1, 1]} : vector<1x512xf32> to vector<1x384xf32>
    %cst_21 = arith.constant 5.000000e-01 : f32
    %39 = vector.broadcast %cst_21 : f32 to vector<1x384xf32>
    %40 = arith.mulf %39, %38 : vector<1x384xf32>
    %41 = math.tanh %40 : vector<1x384xf32>
    %cst_22 = arith.constant 1.000000e+00 : f32
    %42 = vector.broadcast %cst_22 : f32 to vector<1x384xf32>
    %43 = arith.addf %41, %42 : vector<1x384xf32>
    %cst_23 = arith.constant 5.000000e-01 : f32
    %44 = vector.broadcast %cst_23 : f32 to vector<1x384xf32>
    %45 = arith.mulf %44, %43 : vector<1x384xf32>
    %46 = vector.extract_strided_slice %37 {offsets = [0, 384], sizes = [1, 128], strides = [1, 1]} : vector<1x512xf32> to vector<1x128xf32>
    %47 = math.tanh %46 : vector<1x128xf32>
    %48 = vector.extract_strided_slice %45 {offsets = [0, 0], sizes = [1, 128], strides = [1, 1]} : vector<1x384xf32> to vector<1x128xf32>
    %49 = vector.extract_strided_slice %45 {offsets = [0, 128], sizes = [1, 128], strides = [1, 1]} : vector<1x384xf32> to vector<1x128xf32>
    %50 = vector.extract_strided_slice %45 {offsets = [0, 256], sizes = [1, 128], strides = [1, 1]} : vector<1x384xf32> to vector<1x128xf32>
    %51 = arith.mulf %49, %32 : vector<1x128xf32>
    %52 = arith.mulf %48, %47 : vector<1x128xf32>
    %53 = arith.addf %51, %52 : vector<1x128xf32>
    %54 = math.tanh %53 : vector<1x128xf32>
    %55 = arith.mulf %50, %54 : vector<1x128xf32>
    %c0_24 = arith.constant 0 : index
    %c0_25 = arith.constant 0 : index
    %56 = vector.load %arg9[%c0_24, %c0_25] : memref<8x128xf32, #tpu.memory_space<vmem>>, vector<1x128xf32>
    tpu.vector_store %arg9[%c0_24, %c0_25], %55 {strides = array<i32>} : memref<8x128xf32, #tpu.memory_space<vmem>>, vector<1x128xf32>,
    %c1_26 = arith.constant 1 : index
    %c0_27 = arith.constant 0 : index
    %57 = vector.load %arg8[%c1_26, %c0_27] : memref<8x512xf32, #tpu.memory_space<vmem>>, vector<1x512xf32>
    %58 = vector.extract_strided_slice %55 {offsets = [0, 0], sizes = [1, 32], strides = [1, 1]} : vector<1x128xf32> to vector<1x32xf32>
    %c0_28 = arith.constant 0 : index
    %c0_29 = arith.constant 0 : index
    %59 = vector.load %arg3[%c0_28, %c0_29] : memref<32x512xf32, #tpu.memory_space<vmem>>, vector<32x512xf32>
    %cst_30 = arith.constant dense<0.000000e+00> : vector<1x512xf32>
    %60 = tpu.matmul %58, %59, %cst_30 {dimension_numbers = #tpu.dot_dimension_numbers<[1], [0], [0], [1], [0, 0, 1, 1], [], []>} : vector<1x32xf32>, vector<32x512xf32>, vector<1x512xf32> -> vector<1x512xf32>
    %61 = arith.addf %57, %60 : vector<1x512xf32>
    %62 = vector.extract_strided_slice %61 {offsets = [0, 0], sizes = [1, 384], strides = [1, 1]} : vector<1x512xf32> to vector<1x384xf32>
    %cst_31 = arith.constant 5.000000e-01 : f32
    %63 = vector.broadcast %cst_31 : f32 to vector<1x384xf32>
    %64 = arith.mulf %63, %62 : vector<1x384xf32>
    %65 = math.tanh %64 : vector<1x384xf32>
    %cst_32 = arith.constant 1.000000e+00 : f32
    %66 = vector.broadcast %cst_32 : f32 to vector<1x384xf32>
    %67 = arith.addf %65, %66 : vector<1x384xf32>
    %cst_33 = arith.constant 5.000000e-01 : f32
    %68 = vector.broadcast %cst_33 : f32 to vector<1x384xf32>
    %69 = arith.mulf %68, %67 : vector<1x384xf32>
    %70 = vector.extract_strided_slice %61 {offsets = [0, 384], sizes = [1, 128], strides = [1, 1]} : vector<1x512xf32> to vector<1x128xf32>
    %71 = math.tanh %70 : vector<1x128xf32>
    %72 = vector.extract_strided_slice %69 {offsets = [0, 0], sizes = [1, 128], strides = [1, 1]} : vector<1x384xf32> to vector<1x128xf32>
    %73 = vector.extract_strided_slice %69 {offsets = [0, 128], sizes = [1, 128], strides = [1, 1]} : vector<1x384xf32> to vector<1x128xf32>
    %74 = vector.extract_strided_slice %69 {offsets = [0, 256], sizes = [1, 128], strides = [1, 1]} : vector<1x384xf32> to vector<1x128xf32>
    %75 = arith.mulf %73, %53 : vector<1x128xf32>
    %76 = arith.mulf %72, %71 : vector<1x128xf32>
    %77 = arith.addf %75, %76 : vector<1x128xf32>
    %78 = math.tanh %77 : vector<1x128xf32>
    %79 = arith.mulf %74, %78 : vector<1x128xf32>
    %c1_34 = arith.constant 1 : index
    %c0_35 = arith.constant 0 : index
    %80 = vector.load %arg9[%c1_34, %c0_35] : memref<8x128xf32, #tpu.memory_space<vmem>>, vector<1x128xf32>
    tpu.vector_store %arg9[%c1_34, %c0_35], %79 {strides = array<i32>} : memref<8x128xf32, #tpu.memory_space<vmem>>, vector<1x128xf32>,
    %c2_36 = arith.constant 2 : index
    %c0_37 = arith.constant 0 : index
    %81 = vector.load %arg8[%c2_36, %c0_37] : memref<8x512xf32, #tpu.memory_space<vmem>>, vector<1x512xf32>
    %82 = vector.extract_strided_slice %79 {offsets = [0, 0], sizes = [1, 32], strides = [1, 1]} : vector<1x128xf32> to vector<1x32xf32>
    %c0_38 = arith.constant 0 : index
    %c0_39 = arith.constant 0 : index
    %83 = vector.load %arg3[%c0_38, %c0_39] : memref<32x512xf32, #tpu.memory_space<vmem>>, vector<32x512xf32>
    %cst_40 = arith.constant dense<0.000000e+00> : vector<1x512xf32>
    %84 = tpu.matmul %82, %83, %cst_40 {dimension_numbers = #tpu.dot_dimension_numbers<[1], [0], [0], [1], [0, 0, 1, 1], [], []>} : vector<1x32xf32>, vector<32x512xf32>, vector<1x512xf32> -> vector<1x512xf32>
    %85 = arith.addf %81, %84 : vector<1x512xf32>
    %86 = vector.extract_strided_slice %85 {offsets = [0, 0], sizes = [1, 384], strides = [1, 1]} : vector<1x512xf32> to vector<1x384xf32>
    %cst_41 = arith.constant 5.000000e-01 : f32
    %87 = vector.broadcast %cst_41 : f32 to vector<1x384xf32>
    %88 = arith.mulf %87, %86 : vector<1x384xf32>
    %89 = math.tanh %88 : vector<1x384xf32>
    %cst_42 = arith.constant 1.000000e+00 : f32
    %90 = vector.broadcast %cst_42 : f32 to vector<1x384xf32>
    %91 = arith.addf %89, %90 : vector<1x384xf32>
    %cst_43 = arith.constant 5.000000e-01 : f32
    %92 = vector.broadcast %cst_43 : f32 to vector<1x384xf32>
    %93 = arith.mulf %92, %91 : vector<1x384xf32>
    %94 = vector.extract_strided_slice %85 {offsets = [0, 384], sizes = [1, 128], strides = [1, 1]} : vector<1x512xf32> to vector<1x128xf32>
    %95 = math.tanh %94 : vector<1x128xf32>
    %96 = vector.extract_strided_slice %93 {offsets = [0, 0], sizes = [1, 128], strides = [1, 1]} : vector<1x384xf32> to vector<1x128xf32>
    %97 = vector.extract_strided_slice %93 {offsets = [0, 128], sizes = [1, 128], strides = [1, 1]} : vector<1x384xf32> to vector<1x128xf32>
    %98 = vector.extract_strided_slice %93 {offsets = [0, 256], sizes = [1, 128], strides = [1, 1]} : vector<1x384xf32> to vector<1x128xf32>
    %99 = arith.mulf %97, %77 : vector<1x128xf32>
    %100 = arith.mulf %96, %95 : vector<1x128xf32>
    %101 = arith.addf %99, %100 : vector<1x128xf32>
    %102 = math.tanh %101 : vector<1x128xf32>
    %103 = arith.mulf %98, %102 : vector<1x128xf32>
    %c2_44 = arith.constant 2 : index
    %c0_45 = arith.constant 0 : index
    %104 = vector.load %arg9[%c2_44, %c0_45] : memref<8x128xf32, #tpu.memory_space<vmem>>, vector<1x128xf32>
    tpu.vector_store %arg9[%c2_44, %c0_45], %103 {strides = array<i32>} : memref<8x128xf32, #tpu.memory_space<vmem>>, vector<1x128xf32>,
    %c3_46 = arith.constant 3 : index
    %c0_47 = arith.constant 0 : index
    %105 = vector.load %arg8[%c3_46, %c0_47] : memref<8x512xf32, #tpu.memory_space<vmem>>, vector<1x512xf32>
    %106 = vector.extract_strided_slice %103 {offsets = [0, 0], sizes = [1, 32], strides = [1, 1]} : vector<1x128xf32> to vector<1x32xf32>
    %c0_48 = arith.constant 0 : index
    %c0_49 = arith.constant 0 : index
    %107 = vector.load %arg3[%c0_48, %c0_49] : memref<32x512xf32, #tpu.memory_space<vmem>>, vector<32x512xf32>
    %cst_50 = arith.constant dense<0.000000e+00> : vector<1x512xf32>
    %108 = tpu.matmul %106, %107, %cst_50 {dimension_numbers = #tpu.dot_dimension_numbers<[1], [0], [0], [1], [0, 0, 1, 1], [], []>} : vector<1x32xf32>, vector<32x512xf32>, vector<1x512xf32> -> vector<1x512xf32>
    %109 = arith.addf %105, %108 : vector<1x512xf32>
    %110 = vector.extract_strided_slice %109 {offsets = [0, 0], sizes = [1, 384], strides = [1, 1]} : vector<1x512xf32> to vector<1x384xf32>
    %cst_51 = arith.constant 5.000000e-01 : f32
    %111 = vector.broadcast %cst_51 : f32 to vector<1x384xf32>
    %112 = arith.mulf %111, %110 : vector<1x384xf32>
    %113 = math.tanh %112 : vector<1x384xf32>
    %cst_52 = arith.constant 1.000000e+00 : f32
    %114 = vector.broadcast %cst_52 : f32 to vector<1x384xf32>
    %115 = arith.addf %113, %114 : vector<1x384xf32>
    %cst_53 = arith.constant 5.000000e-01 : f32
    %116 = vector.broadcast %cst_53 : f32 to vector<1x384xf32>
    %117 = arith.mulf %116, %115 : vector<1x384xf32>
    %118 = vector.extract_strided_slice %109 {offsets = [0, 384], sizes = [1, 128], strides = [1, 1]} : vector<1x512xf32> to vector<1x128xf32>
    %119 = math.tanh %118 : vector<1x128xf32>
    %120 = vector.extract_strided_slice %117 {offsets = [0, 0], sizes = [1, 128], strides = [1, 1]} : vector<1x384xf32> to vector<1x128xf32>
    %121 = vector.extract_strided_slice %117 {offsets = [0, 128], sizes = [1, 128], strides = [1, 1]} : vector<1x384xf32> to vector<1x128xf32>
    %122 = vector.extract_strided_slice %117 {offsets = [0, 256], sizes = [1, 128], strides = [1, 1]} : vector<1x384xf32> to vector<1x128xf32>
    %123 = arith.mulf %121, %101 : vector<1x128xf32>
    %124 = arith.mulf %120, %119 : vector<1x128xf32>
    %125 = arith.addf %123, %124 : vector<1x128xf32>
    %126 = math.tanh %125 : vector<1x128xf32>
    %127 = arith.mulf %122, %126 : vector<1x128xf32>
    %c3_54 = arith.constant 3 : index
    %c0_55 = arith.constant 0 : index
    %128 = vector.load %arg9[%c3_54, %c0_55] : memref<8x128xf32, #tpu.memory_space<vmem>>, vector<1x128xf32>
    tpu.vector_store %arg9[%c3_54, %c0_55], %127 {strides = array<i32>} : memref<8x128xf32, #tpu.memory_space<vmem>>, vector<1x128xf32>,
    %c4_56 = arith.constant 4 : index
    %c0_57 = arith.constant 0 : index
    %129 = vector.load %arg8[%c4_56, %c0_57] : memref<8x512xf32, #tpu.memory_space<vmem>>, vector<1x512xf32>
    %130 = vector.extract_strided_slice %127 {offsets = [0, 0], sizes = [1, 32], strides = [1, 1]} : vector<1x128xf32> to vector<1x32xf32>
    %c0_58 = arith.constant 0 : index
    %c0_59 = arith.constant 0 : index
    %131 = vector.load %arg3[%c0_58, %c0_59] : memref<32x512xf32, #tpu.memory_space<vmem>>, vector<32x512xf32>
    %cst_60 = arith.constant dense<0.000000e+00> : vector<1x512xf32>
    %132 = tpu.matmul %130, %131, %cst_60 {dimension_numbers = #tpu.dot_dimension_numbers<[1], [0], [0], [1], [0, 0, 1, 1], [], []>} : vector<1x32xf32>, vector<32x512xf32>, vector<1x512xf32> -> vector<1x512xf32>
    %133 = arith.addf %129, %132 : vector<1x512xf32>
    %134 = vector.extract_strided_slice %133 {offsets = [0, 0], sizes = [1, 384], strides = [1, 1]} : vector<1x512xf32> to vector<1x384xf32>
    %cst_61 = arith.constant 5.000000e-01 : f32
    %135 = vector.broadcast %cst_61 : f32 to vector<1x384xf32>
    %136 = arith.mulf %135, %134 : vector<1x384xf32>
    %137 = math.tanh %136 : vector<1x384xf32>
    %cst_62 = arith.constant 1.000000e+00 : f32
    %138 = vector.broadcast %cst_62 : f32 to vector<1x384xf32>
    %139 = arith.addf %137, %138 : vector<1x384xf32>
    %cst_63 = arith.constant 5.000000e-01 : f32
    %140 = vector.broadcast %cst_63 : f32 to vector<1x384xf32>
    %141 = arith.mulf %140, %139 : vector<1x384xf32>
    %142 = vector.extract_strided_slice %133 {offsets = [0, 384], sizes = [1, 128], strides = [1, 1]} : vector<1x512xf32> to vector<1x128xf32>
    %143 = math.tanh %142 : vector<1x128xf32>
    %144 = vector.extract_strided_slice %141 {offsets = [0, 0], sizes = [1, 128], strides = [1, 1]} : vector<1x384xf32> to vector<1x128xf32>
    %145 = vector.extract_strided_slice %141 {offsets = [0, 128], sizes = [1, 128], strides = [1, 1]} : vector<1x384xf32> to vector<1x128xf32>
    %146 = vector.extract_strided_slice %141 {offsets = [0, 256], sizes = [1, 128], strides = [1, 1]} : vector<1x384xf32> to vector<1x128xf32>
    %147 = arith.mulf %145, %125 : vector<1x128xf32>
    %148 = arith.mulf %144, %143 : vector<1x128xf32>
    %149 = arith.addf %147, %148 : vector<1x128xf32>
    %150 = math.tanh %149 : vector<1x128xf32>
    %151 = arith.mulf %146, %150 : vector<1x128xf32>
    %c4_64 = arith.constant 4 : index
    %c0_65 = arith.constant 0 : index
    %152 = vector.load %arg9[%c4_64, %c0_65] : memref<8x128xf32, #tpu.memory_space<vmem>>, vector<1x128xf32>
    tpu.vector_store %arg9[%c4_64, %c0_65], %151 {strides = array<i32>} : memref<8x128xf32, #tpu.memory_space<vmem>>, vector<1x128xf32>,
    %c5_66 = arith.constant 5 : index
    %c0_67 = arith.constant 0 : index
    %153 = vector.load %arg8[%c5_66, %c0_67] : memref<8x512xf32, #tpu.memory_space<vmem>>, vector<1x512xf32>
    %154 = vector.extract_strided_slice %151 {offsets = [0, 0], sizes = [1, 32], strides = [1, 1]} : vector<1x128xf32> to vector<1x32xf32>
    %c0_68 = arith.constant 0 : index
    %c0_69 = arith.constant 0 : index
    %155 = vector.load %arg3[%c0_68, %c0_69] : memref<32x512xf32, #tpu.memory_space<vmem>>, vector<32x512xf32>
    %cst_70 = arith.constant dense<0.000000e+00> : vector<1x512xf32>
    %156 = tpu.matmul %154, %155, %cst_70 {dimension_numbers = #tpu.dot_dimension_numbers<[1], [0], [0], [1], [0, 0, 1, 1], [], []>} : vector<1x32xf32>, vector<32x512xf32>, vector<1x512xf32> -> vector<1x512xf32>
    %157 = arith.addf %153, %156 : vector<1x512xf32>
    %158 = vector.extract_strided_slice %157 {offsets = [0, 0], sizes = [1, 384], strides = [1, 1]} : vector<1x512xf32> to vector<1x384xf32>
    %cst_71 = arith.constant 5.000000e-01 : f32
    %159 = vector.broadcast %cst_71 : f32 to vector<1x384xf32>
    %160 = arith.mulf %159, %158 : vector<1x384xf32>
    %161 = math.tanh %160 : vector<1x384xf32>
    %cst_72 = arith.constant 1.000000e+00 : f32
    %162 = vector.broadcast %cst_72 : f32 to vector<1x384xf32>
    %163 = arith.addf %161, %162 : vector<1x384xf32>
    %cst_73 = arith.constant 5.000000e-01 : f32
    %164 = vector.broadcast %cst_73 : f32 to vector<1x384xf32>
    %165 = arith.mulf %164, %163 : vector<1x384xf32>
    %166 = vector.extract_strided_slice %157 {offsets = [0, 384], sizes = [1, 128], strides = [1, 1]} : vector<1x512xf32> to vector<1x128xf32>
    %167 = math.tanh %166 : vector<1x128xf32>
    %168 = vector.extract_strided_slice %165 {offsets = [0, 0], sizes = [1, 128], strides = [1, 1]} : vector<1x384xf32> to vector<1x128xf32>
    %169 = vector.extract_strided_slice %165 {offsets = [0, 128], sizes = [1, 128], strides = [1, 1]} : vector<1x384xf32> to vector<1x128xf32>
    %170 = vector.extract_strided_slice %165 {offsets = [0, 256], sizes = [1, 128], strides = [1, 1]} : vector<1x384xf32> to vector<1x128xf32>
    %171 = arith.mulf %169, %149 : vector<1x128xf32>
    %172 = arith.mulf %168, %167 : vector<1x128xf32>
    %173 = arith.addf %171, %172 : vector<1x128xf32>
    %174 = math.tanh %173 : vector<1x128xf32>
    %175 = arith.mulf %170, %174 : vector<1x128xf32>
    %c5_74 = arith.constant 5 : index
    %c0_75 = arith.constant 0 : index
    %176 = vector.load %arg9[%c5_74, %c0_75] : memref<8x128xf32, #tpu.memory_space<vmem>>, vector<1x128xf32>
    tpu.vector_store %arg9[%c5_74, %c0_75], %175 {strides = array<i32>} : memref<8x128xf32, #tpu.memory_space<vmem>>, vector<1x128xf32>,
    %c6_76 = arith.constant 6 : index
    %c0_77 = arith.constant 0 : index
    %177 = vector.load %arg8[%c6_76, %c0_77] : memref<8x512xf32, #tpu.memory_space<vmem>>, vector<1x512xf32>
    %178 = vector.extract_strided_slice %175 {offsets = [0, 0], sizes = [1, 32], strides = [1, 1]} : vector<1x128xf32> to vector<1x32xf32>
    %c0_78 = arith.constant 0 : index
    %c0_79 = arith.constant 0 : index
    %179 = vector.load %arg3[%c0_78, %c0_79] : memref<32x512xf32, #tpu.memory_space<vmem>>, vector<32x512xf32>
    %cst_80 = arith.constant dense<0.000000e+00> : vector<1x512xf32>
    %180 = tpu.matmul %178, %179, %cst_80 {dimension_numbers = #tpu.dot_dimension_numbers<[1], [0], [0], [1], [0, 0, 1, 1], [], []>} : vector<1x32xf32>, vector<32x512xf32>, vector<1x512xf32> -> vector<1x512xf32>
    %181 = arith.addf %177, %180 : vector<1x512xf32>
    %182 = vector.extract_strided_slice %181 {offsets = [0, 0], sizes = [1, 384], strides = [1, 1]} : vector<1x512xf32> to vector<1x384xf32>
    %cst_81 = arith.constant 5.000000e-01 : f32
    %183 = vector.broadcast %cst_81 : f32 to vector<1x384xf32>
    %184 = arith.mulf %183, %182 : vector<1x384xf32>
    %185 = math.tanh %184 : vector<1x384xf32>
    %cst_82 = arith.constant 1.000000e+00 : f32
    %186 = vector.broadcast %cst_82 : f32 to vector<1x384xf32>
    %187 = arith.addf %185, %186 : vector<1x384xf32>
    %cst_83 = arith.constant 5.000000e-01 : f32
    %188 = vector.broadcast %cst_83 : f32 to vector<1x384xf32>
    %189 = arith.mulf %188, %187 : vector<1x384xf32>
    %190 = vector.extract_strided_slice %181 {offsets = [0, 384], sizes = [1, 128], strides = [1, 1]} : vector<1x512xf32> to vector<1x128xf32>
    %191 = math.tanh %190 : vector<1x128xf32>
    %192 = vector.extract_strided_slice %189 {offsets = [0, 0], sizes = [1, 128], strides = [1, 1]} : vector<1x384xf32> to vector<1x128xf32>
    %193 = vector.extract_strided_slice %189 {offsets = [0, 128], sizes = [1, 128], strides = [1, 1]} : vector<1x384xf32> to vector<1x128xf32>
    %194 = vector.extract_strided_slice %189 {offsets = [0, 256], sizes = [1, 128], strides = [1, 1]} : vector<1x384xf32> to vector<1x128xf32>
    %195 = arith.mulf %193, %173 : vector<1x128xf32>
    %196 = arith.mulf %192, %191 : vector<1x128xf32>
    %197 = arith.addf %195, %196 : vector<1x128xf32>
    %198 = math.tanh %197 : vector<1x128xf32>
    %199 = arith.mulf %194, %198 : vector<1x128xf32>
    %c6_84 = arith.constant 6 : index
    %c0_85 = arith.constant 0 : index
    %200 = vector.load %arg9[%c6_84, %c0_85] : memref<8x128xf32, #tpu.memory_space<vmem>>, vector<1x128xf32>
    tpu.vector_store %arg9[%c6_84, %c0_85], %199 {strides = array<i32>} : memref<8x128xf32, #tpu.memory_space<vmem>>, vector<1x128xf32>,
    %c7_86 = arith.constant 7 : index
    %c0_87 = arith.constant 0 : index
    %201 = vector.load %arg8[%c7_86, %c0_87] : memref<8x512xf32, #tpu.memory_space<vmem>>, vector<1x512xf32>
    %202 = vector.extract_strided_slice %199 {offsets = [0, 0], sizes = [1, 32], strides = [1, 1]} : vector<1x128xf32> to vector<1x32xf32>
    %c0_88 = arith.constant 0 : index
    %c0_89 = arith.constant 0 : index
    %203 = vector.load %arg3[%c0_88, %c0_89] : memref<32x512xf32, #tpu.memory_space<vmem>>, vector<32x512xf32>
    %cst_90 = arith.constant dense<0.000000e+00> : vector<1x512xf32>
    %204 = tpu.matmul %202, %203, %cst_90 {dimension_numbers = #tpu.dot_dimension_numbers<[1], [0], [0], [1], [0, 0, 1, 1], [], []>} : vector<1x32xf32>, vector<32x512xf32>, vector<1x512xf32> -> vector<1x512xf32>
    %205 = arith.addf %201, %204 : vector<1x512xf32>
    %206 = vector.extract_strided_slice %205 {offsets = [0, 0], sizes = [1, 384], strides = [1, 1]} : vector<1x512xf32> to vector<1x384xf32>
    %cst_91 = arith.constant 5.000000e-01 : f32
    %207 = vector.broadcast %cst_91 : f32 to vector<1x384xf32>
    %208 = arith.mulf %207, %206 : vector<1x384xf32>
    %209 = math.tanh %208 : vector<1x384xf32>
    %cst_92 = arith.constant 1.000000e+00 : f32
    %210 = vector.broadcast %cst_92 : f32 to vector<1x384xf32>
    %211 = arith.addf %209, %210 : vector<1x384xf32>
    %cst_93 = arith.constant 5.000000e-01 : f32
    %212 = vector.broadcast %cst_93 : f32 to vector<1x384xf32>
    %213 = arith.mulf %212, %211 : vector<1x384xf32>
    %214 = vector.extract_strided_slice %205 {offsets = [0, 384], sizes = [1, 128], strides = [1, 1]} : vector<1x512xf32> to vector<1x128xf32>
    %215 = math.tanh %214 : vector<1x128xf32>
    %216 = vector.extract_strided_slice %213 {offsets = [0, 0], sizes = [1, 128], strides = [1, 1]} : vector<1x384xf32> to vector<1x128xf32>
    %217 = vector.extract_strided_slice %213 {offsets = [0, 128], sizes = [1, 128], strides = [1, 1]} : vector<1x384xf32> to vector<1x128xf32>
    %218 = vector.extract_strided_slice %213 {offsets = [0, 256], sizes = [1, 128], strides = [1, 1]} : vector<1x384xf32> to vector<1x128xf32>
    %219 = arith.mulf %217, %197 : vector<1x128xf32>
    %220 = arith.mulf %216, %215 : vector<1x128xf32>
    %221 = arith.addf %219, %220 : vector<1x128xf32>
    %222 = math.tanh %221 : vector<1x128xf32>
    %223 = arith.mulf %218, %222 : vector<1x128xf32>
    %c7_94 = arith.constant 7 : index
    %c0_95 = arith.constant 0 : index
    %224 = vector.load %arg9[%c7_94, %c0_95] : memref<8x128xf32, #tpu.memory_space<vmem>>, vector<1x128xf32>
    tpu.vector_store %arg9[%c7_94, %c0_95], %223 {strides = array<i32>} : memref<8x128xf32, #tpu.memory_space<vmem>>, vector<1x128xf32>,
    %c0_96 = arith.constant 0 : index
    %c0_97 = arith.constant 0 : index
    %225 = vector.load %arg9[%c0_96, %c0_97] : memref<8x128xf32, #tpu.memory_space<vmem>>, vector<8x128xf32>
    %c0_98 = arith.constant 0 : index
    %c0_99 = arith.constant 0 : index
    %226 = vector.load %arg5[%c0_98, %c0_99] : memref<128x128xf32, #tpu.memory_space<vmem>>, vector<128x128xf32>
    %cst_100 = arith.constant dense<0.000000e+00> : vector<8x128xf32>
    %227 = tpu.matmul %225, %226, %cst_100 {dimension_numbers = #tpu.dot_dimension_numbers<[1], [0], [0], [1], [0, 0, 1, 1], [], []>} : vector<8x128xf32>, vector<128x128xf32>, vector<8x128xf32> -> vector<8x128xf32>
    %c0_101 = arith.constant 0 : index
    %c0_102 = arith.constant 0 : index
    %228 = vector.load %arg6[%c0_101, %c0_102] : memref<1x128xf32, #tpu.memory_space<vmem>>, vector<1x128xf32>
    %229 = vector.broadcast %228 : vector<1x128xf32> to vector<8x128xf32>
    %230 = arith.addf %227, %229 : vector<8x128xf32>
    %cst_103 = arith.constant dense<0xFF800000> : vector<8xf32>
    %231 = vector.multi_reduction <maximumf>, %230, %cst_103 [1] : vector<8x128xf32> to vector<8xf32>
    %232 = vector.shape_cast %231 : vector<8xf32> to vector<8x1xf32>
    %233 = vector.broadcast %232 : vector<8x1xf32> to vector<8x128xf32>
    %234 = arith.subf %230, %233 : vector<8x128xf32>
    %235 = math.exp %234 : vector<8x128xf32>
    %cst_104 = arith.constant dense<0.000000e+00> : vector<8xf32>
    %236 = vector.multi_reduction <add>, %235, %cst_104 [1] : vector<8x128xf32> to vector<8xf32>
    %237 = vector.shape_cast %236 : vector<8xf32> to vector<8x1xf32>
    %238 = math.log %237 : vector<8x1xf32>
    %239 = vector.broadcast %238 : vector<8x1xf32> to vector<8x128xf32>
    %240 = arith.subf %234, %239 : vector<8x128xf32>
    %c0_105 = arith.constant 0 : index
    %c0_106 = arith.constant 0 : index
    %241 = vector.load %arg7[%c0_105, %c0_106] : memref<8x128xf32, #tpu.memory_space<vmem>>, vector<8x128xf32>
    tpu.vector_store %arg7[%c0_105, %c0_106], %240 {strides = array<i32>} : memref<8x128xf32, #tpu.memory_space<vmem>>, vector<8x128xf32>,
    return
  }
}

</mosaic_0001>

<llo_original>
// kernel: tpu_custom_call.1
$region0: #{tpu_custom_call.1}
  #allocation0 [shape = 'u32[]', space=smem, size = 0x4, offset = 0x4, fixed_abs, tag = 'smem constant byte address 0x4 - core index']
  #allocation1 [shape = 'u32[144,128]{1,0:T(1,128)}', space=vmem, size = 0x12000, scoped, tag = 'internal scratch']
  #allocation2 [shape = 'f32[8,512]{1,0:T(8,128)}', space=vmem, size = 0x4000, scoped, tag = 'scratch operand']
  #allocation3 [shape = 'f32[8,128]{1,0:T(8,128)}', space=vmem, size = 0x1000, scoped, tag = 'scratch operand']
  %s0 = inlined_call_operand.hbm [shape: s32[8], index: 0, kind: input, shape index: {}]
  %s1 = inlined_call_operand.hbm [shape: f32[20,32], index: 1, kind: input, shape index: {}]
  %s2 = inlined_call_operand.hbm [shape: f32[32,512], index: 2, kind: input, shape index: {}]
  %s3 = inlined_call_operand.hbm [shape: f32[32,512], index: 3, kind: input, shape index: {}]
  %s4 = inlined_call_operand.vmem [shape: f32[1,512], index: 4, kind: input, shape index: {}]
  %s5 = inlined_call_operand.hbm [shape: f32[128,128], index: 5, kind: input, shape index: {}]
  %s6 = inlined_call_operand.vmem [shape: f32[1,128], index: 6, kind: input, shape index: {}]
  %s7 = inlined_call_operand.hbm [shape: f32[8,128], index: 7, kind: output, shape index: {}]
  %s8 = sld [smem:[#allocation0]]
  $region58: #{tpu_custom_call.1} parent=0
    _
  %s10 = ssub.s32 1, %s8
  %s11 = scalar_select 0, %s10, %s8
  $region1: #{tpu_custom_call.1} parent=0
    #allocation4 [shape = 'u8[512]{0}', space=smem, size = 0x200, scoped, tag = 'input window, operand 0, single buffered']
    #allocation5 [shape = 's32[1]{0}', space=sflag, size = 0x4, scoped, tag = 'scoped memory for tpu_custom_call.1']
    #allocation6 [shape = 's32[1]{0}', space=sflag, size = 0x4, scoped, tag = 'scoped memory for tpu_custom_call.1']
    #allocation7 [shape = 's32[1]{0}', space=sflag, size = 0x4, scoped, tag = 'scoped memory for tpu_custom_call.1']
    #allocation8 [shape = 'u8[12288]{0}', space=vmem, size = 0x3000, scoped, tag = 'input window, operand 1, single buffered']
    #allocation9 [shape = 'u8[65536]{0}', space=vmem, size = 0x10000, scoped, tag = 'input window, operand 2, single buffered']
    #allocation10 [shape = 's32[1]{0}', space=sflag, size = 0x4, scoped, tag = 'scoped memory for tpu_custom_call.1']
    #allocation11 [shape = 'u8[65536]{0}', space=vmem, size = 0x10000, scoped, tag = 'input window, operand 3, single buffered']
    #allocation12 [shape = 'u8[65536]{0}', space=vmem, size = 0x10000, scoped, tag = 'input window, operand 5, single buffered']
    #allocation13 [shape = 's32[1]{0}', space=sflag, size = 0x4, scoped, tag = 'scoped memory for tpu_custom_call.1']
    #allocation14 [shape = 'u8[4096]{0}', space=vmem, size = 0x1000, scoped, tag = 'output window, operand 0, single buffered']
    %12 = vsyncpa [#allocation7], 0
    %13 = vsyncpa [#allocation5], 0
    %14 = vsyncpa [#allocation10], 0
    %15 = vsyncpa [#allocation13], 0
    %16 = vsyncpa [#allocation6], 0
    // Predicated region
    $region2: #{tpu_custom_call.1} parent=1 // pred_check
      _
    $region3: #{tpu_custom_call.1} parent=1 // pred_check_branch
      %18 = sbr.rel (0) target = $region5
    $region4: #{tpu_custom_call.1} parent=1 // pred_region
      %s20 = ssub.s32 16, 16
      %21 = vsyncadd [#allocation7], %s20
      %24 = dma.hbm_to_smem %s0, 16, [#allocation4], [#allocation7]
    $region5: #{tpu_custom_call.1} parent=1 // pred_fallthru
      _
    // Predicated region
    $region6: #{tpu_custom_call.1} parent=1 // pred_check
      _
    $region7: #{tpu_custom_call.1} parent=1 // pred_check_branch
      %26 = sbr.rel (0) target = $region9
    $region8: #{tpu_custom_call.1} parent=1 // pred_region
      %s28 = ssub.s32 384, 384
      %29 = vsyncadd [#allocation5], %s28
      %s30 = sshll.u32 [#allocation8], 4
      %s31 = int_to_ptr.vmem [resolvable:$true] %s30
      %36 = dma.hbm_to_vmem [thread:$0]  %s1, 384, %s31, [#allocation5], 128, 128, 8
    $region9: #{tpu_custom_call.1} parent=1 // pred_fallthru
      _
    // Predicated region
    $region10: #{tpu_custom_call.1} parent=1 // pred_check
      _
    $region11: #{tpu_custom_call.1} parent=1 // pred_check_branch
      %38 = sbr.rel (0) target = $region13
    $region12: #{tpu_custom_call.1} parent=1 // pred_region
      %s40 = ssub.s32 2048, 2048
      %41 = vsyncadd [#allocation10], %s40
      %s42 = sshll.u32 [#allocation9], 4
      %s43 = int_to_ptr.vmem [resolvable:$true] %s42
      %48 = dma.hbm_to_vmem [thread:$0]  %s2, 2048, %s43, [#allocation10], 512, 512, 32
    $region13: #{tpu_custom_call.1} parent=1 // pred_fallthru
      _
    // Predicated region
    $region14: #{tpu_custom_call.1} parent=1 // pred_check
      _
    $region15: #{tpu_custom_call.1} parent=1 // pred_check_branch
      %50 = sbr.rel (0) target = $region17
    $region16: #{tpu_custom_call.1} parent=1 // pred_region
      %s52 = ssub.s32 2048, 2048
      %53 = vsyncadd [#allocation10], %s52
      %s54 = sshll.u32 [#allocation11], 4
      %s55 = int_to_ptr.vmem [resolvable:$true] %s54
      %60 = dma.hbm_to_vmem [thread:$0]  %s3, 2048, %s55, [#allocation10], 512, 512, 32
    $region17: #{tpu_custom_call.1} parent=1 // pred_fallthru
      _
    // Predicated region
    $region18: #{tpu_custom_call.1} parent=1 // pred_check
      _
    $region19: #{tpu_custom_call.1} parent=1 // pred_check_branch
      %62 = sbr.rel (0) target = $region21
    $region20: #{tpu_custom_call.1} parent=1 // pred_region
      _
    $region21: #{tpu_custom_call.1} parent=1 // pred_fallthru
      _
    // Predicated region
    $region22: #{tpu_custom_call.1} parent=1 // pred_check
      _
    $region23: #{tpu_custom_call.1} parent=1 // pred_check_branch
      %64 = sbr.rel (0) target = $region25
    $region24: #{tpu_custom_call.1} parent=1 // pred_region
      %s66 = ssub.s32 2048, 2048
      %67 = vsyncadd [#allocation13], %s66
      %s68 = sshll.u32 [#allocation12], 4
      %s69 = int_to_ptr.vmem [resolvable:$true] %s68
      %74 = dma.hbm_to_vmem [thread:$0]  %s5, 2048, %s69, [#allocation13], 128, 128, 8
    $region25: #{tpu_custom_call.1} parent=1 // pred_fallthru
      _
    // Predicated region
    $region26: #{tpu_custom_call.1} parent=1 // pred_check
      _
    $region27: #{tpu_custom_call.1} parent=1 // pred_check_branch
      %76 = sbr.rel (0) target = $region29
    $region28: #{tpu_custom_call.1} parent=1 // pred_region
      _
    $region29: #{tpu_custom_call.1} parent=1 // pred_fallthru
      _
    // Predicated region
    $region30: #{tpu_custom_call.1} parent=1 // pred_check
      _
    $region31: #{tpu_custom_call.1} parent=1 // pred_check_branch
      %78 = sbr.rel (0) target = $region33
    $region32: #{tpu_custom_call.1} parent=1 // pred_region
      %79 = dma.done [#allocation7], 16
    $region33: #{tpu_custom_call.1} parent=1 // pred_fallthru
      _
    // Predicated region
    $region34: #{tpu_custom_call.1} parent=1 // pred_check
      _
    $region35: #{tpu_custom_call.1} parent=1 // pred_check_branch
      %81 = sbr.rel (0) target = $region37
    $region36: #{tpu_custom_call.1} parent=1 // pred_region
      %82 = dma.done [#allocation5], 384
    $region37: #{tpu_custom_call.1} parent=1 // pred_fallthru
      _
    // Predicated region
    $region38: #{tpu_custom_call.1} parent=1 // pred_check
      _
    $region39: #{tpu_custom_call.1} parent=1 // pred_check_branch
      %84 = sbr.rel (0) target = $region41
    $region40: #{tpu_custom_call.1} parent=1 // pred_region
      %85 = dma.done [#allocation10], 2048
    $region41: #{tpu_custom_call.1} parent=1 // pred_fallthru
      _
    // Predicated region
    $region42: #{tpu_custom_call.1} parent=1 // pred_check
      _
    $region43: #{tpu_custom_call.1} parent=1 // pred_check_branch
      %87 = sbr.rel (0) target = $region45
    $region44: #{tpu_custom_call.1} parent=1 // pred_region
      %88 = dma.done [#allocation10], 2048
    $region45: #{tpu_custom_call.1} parent=1 // pred_fallthru
      _
    // Predicated region
    $region46: #{tpu_custom_call.1} parent=1 // pred_check
      _
    $region47: #{tpu_custom_call.1} parent=1 // pred_check_branch
      %90 = sbr.rel (0) target = $region49
    $region48: #{tpu_custom_call.1} parent=1 // pred_region
      %91 = dma.done [#allocation13], 2048
    $region49: #{tpu_custom_call.1} parent=1 // pred_fallthru
      _
    %92 = sfence
    %s93 = sld [smem:[#allocation4]]
    %s94 = scalar_lea.vmem [#allocation8], %s93
    %v95 = vld [vmem:[%s94] sm:$0x1]
    %s96 = sld [smem:[#allocation4 + $0x1]]
    %s97 = scalar_lea.vmem [#allocation8], %s96
    %v98 = vld [vmem:[%s97] sm:$0x1]
    %s99 = sld [smem:[#allocation4 + $0x2]]
    %s100 = scalar_lea.vmem [#allocation8], %s99
    %v101 = vld [vmem:[%s100] sm:$0x1]
    %s102 = sld [smem:[#allocation4 + $0x3]]
    %s103 = scalar_lea.vmem [#allocation8], %s102
    %v104 = vld [vmem:[%s103] sm:$0x1]
    %s105 = sld [smem:[#allocation4 + $0x4]]
    %s106 = scalar_lea.vmem [#allocation8], %s105
    %v107 = vld [vmem:[%s106] sm:$0x1]
    %s108 = sld [smem:[#allocation4 + $0x5]]
    %s109 = scalar_lea.vmem [#allocation8], %s108
    %v110 = vld [vmem:[%s109] sm:$0x1]
    %s111 = sld [smem:[#allocation4 + $0x6]]
    %s112 = scalar_lea.vmem [#allocation8], %s111
    %v113 = vld [vmem:[%s112] sm:$0x1]
    %s114 = sld [smem:[#allocation4 + $0x7]]
    %s115 = scalar_lea.vmem [#allocation8], %s114
    %v116 = vld [vmem:[%s115] sm:$0x1]
    %v118 = vrot.slane %v98, 7
    %v121 = vrot.slane %v101, 6
    %v124 = vrot.slane %v104, 5
    %v127 = vrot.slane %v107, 4
    %v130 = vrot.slane %v110, 3
    %v133 = vrot.slane %v113, 2
    %v136 = vrot.slane %v116, 1
    %vm138 = vcmask 1040384
    %v139 = vsel %vm138, %v95, %v118
    %vm140 = vcmask 1041408
    %v141 = vsel %vm140, %v139, %v121
    %vm142 = vcmask 1042432
    %v143 = vsel %vm142, %v141, %v124
    %vm144 = vcmask 1043456
    %v145 = vsel %vm144, %v143, %v127
    %vm146 = vcmask 1044480
    %v147 = vsel %vm146, %v145, %v130
    %vm148 = vcmask 1045504
    %v149 = vsel %vm148, %v147, %v133
    %vm150 = vcmask 1046528
    %v151 = vsel %vm150, %v149, %v136
    %v152 = vld [vmem:[#allocation9] sm:$0xff]
    %v153 = vld [vmem:[#allocation9 + $0x8] sm:$0xff]
    %v154 = vld [vmem:[#allocation9 + $0x10] sm:$0xff]
    %v155 = vld [vmem:[#allocation9 + $0x18] sm:$0xff]
    %v156 = vld [vmem:[#allocation9 + $0x20] sm:$0xff]
    %v157 = vld [vmem:[#allocation9 + $0x28] sm:$0xff]
    %v158 = vld [vmem:[#allocation9 + $0x30] sm:$0xff]
    %v159 = vld [vmem:[#allocation9 + $0x38] sm:$0xff]
    %v160 = vld [vmem:[#allocation9 + $0x40] sm:$0xff]
    %v161 = vld [vmem:[#allocation9 + $0x48] sm:$0xff]
    %v162 = vld [vmem:[#allocation9 + $0x50] sm:$0xff]
    %v163 = vld [vmem:[#allocation9 + $0x58] sm:$0xff]
    %v164 = vld [vmem:[#allocation9 + $0x60] sm:$0xff]
    %v165 = vld [vmem:[#allocation9 + $0x68] sm:$0xff]
    %v166 = vld [vmem:[#allocation9 + $0x70] sm:$0xff]
    %v167 = vld [vmem:[#allocation9 + $0x78] sm:$0xff]
    %v168 = vld [vmem:[%s4] sm:$0xf]
    %v170 = vlaneseq
    %v171 = vshrl.u32 %v170, 7
    %v172 = vsub.s32 0, %v171
    %v173 = vrot.slane %v168, %v172
    %v174 = vlaneseq
    %v175 = vshrl.u32 %v174, 7
    %v176 = vsub.s32 1, %v175
    %v177 = vrot.slane %v168, %v176
    %v178 = vlaneseq
    %v179 = vshrl.u32 %v178, 7
    %v180 = vsub.s32 2, %v179
    %v181 = vrot.slane %v168, %v180
    %v182 = vlaneseq
    %v183 = vshrl.u32 %v182, 7
    %v184 = vsub.s32 3, %v183
    %v185 = vrot.slane %v168, %v184
    %vm190 = vcmask 261120
    %v192 = vsel %vm190, %v151, 0
    %194 = vmatprep.subr.mxu0 %v153
    %195 = vmatpush1.msra.mxu0 %v152
    %196 = vmatprep.subr.mxu0 %v157
    %197 = vmatpush1.msra.mxu0 %v156
    %198 = vmatprep.subr.mxu0 %v161
    %199 = vmatpush1.msra.mxu0 %v160
    %200 = vmatprep.subr.mxu0 %v165
    %201 = vmatpush1.msra.mxu0 %v164
    %202 = vmatprep.subr.mxu0 0.0
    %203 = vmatpush1.msra.mxu0 0.0
    %204 = vmatprep.subr.mxu0 0.0
    %205 = vmatpush1.msra.mxu0 0.0
    %206 = vmatprep.subr.mxu0 0.0
    %207 = vmatpush1.msra.mxu0 0.0
    %208 = vmatprep.subr.mxu0 0.0
    %209 = vmatpush1.msra.mxu0 0.0
    %210 = vmatprep.subr.mxu0 0.0
    %211 = vmatpush1.msra.mxu0 0.0
    %212 = vmatprep.subr.mxu0 0.0
    %213 = vmatpush1.msra.mxu0 0.0
    %214 = vmatprep.subr.mxu0 0.0
    %215 = vmatpush1.msra.mxu0 0.0
    %216 = vmatprep.subr.mxu0 0.0
    %217 = vmatpush1.msra.mxu0 0.0
    %218 = vmatprep.subr.mxu0 0.0
    %219 = vmatpush1.msra.mxu0 0.0
    %220 = vmatprep.subr.mxu0 0.0
    %221 = vmatpush1.msra.mxu0 0.0
    %222 = vmatprep.subr.mxu0 0.0
    %223 = vmatpush1.msra.mxu0 0.0
    %224 = vmatprep.subr.mxu0 0.0
    %225 = vmatpush1.msra.mxu0 0.0
    %226 = vmatprep.subr.mxu0 0.0
    %227 = vmatpush1.msra.mxu0 0.0
    %228 = vmatprep.subr.mxu0 0.0
    %229 = vmatpush1.msra.mxu0 0.0
    %230 = vmatprep.subr.mxu0 0.0
    %231 = vmatpush1.msra.mxu0 0.0
    %232 = vmatprep.subr.mxu0 0.0
    %233 = vmatpush1.msra.mxu0 0.0
    %234 = vmatprep.subr.mxu0 0.0
    %235 = vmatpush1.msra.mxu0 0.0
    %236 = vmatprep.subr.mxu0 0.0
    %237 = vmatpush1.msra.mxu0 0.0
    %238 = vmatprep.subr.mxu0 0.0
    %239 = vmatpush1.msra.mxu0 0.0
    %240 = vmatprep.subr.mxu0 0.0
    %241 = vmatpush1.msra.mxu0 0.0
    %242 = vmatprep.subr.mxu0 0.0
    %243 = vmatpush1.msra.mxu0 0.0
    %244 = vmatprep.subr.mxu0 0.0
    %245 = vmatpush1.msra.mxu0 0.0
    %246 = vmatprep.subr.mxu0 0.0
    %247 = vmatpush1.msra.mxu0 0.0
    %248 = vmatprep.subr.mxu0 0.0
    %249 = vmatpush1.msra.mxu0 0.0
    %250 = vmatprep.subr.mxu0 0.0
    %251 = vmatpush1.msra.mxu0 0.0
    %252 = vmatprep.subr.mxu0 0.0
    %253 = vmatpush1.msra.mxu0 0.0
    %254 = vmatprep.subr.mxu0 0.0
    %255 = vmatpush1.msra.mxu0 0.0
    %256 = vmatprep.subr.mxu0 0.0
    %257 = vmatpush1.msra.mxu0 0.0
    %258 = vmatprep.mubr.f32.mxu0 0.0
    %259 = vmatmul.mubr.f32.gmra.mrb[0].mxu0 %v192
    %v260 = vpop.f32.mrb[0].mxu0
    %v261 = vadd.f32 %v173, %v260
    %v262 = vpop.f32.mrb[0].mxu0
    %v263 = vadd.f32 %v177, %v262
    %264 = vdwg.mxu0
    %265 = vmatprep.subr.mxu0 %v155
    %266 = vmatpush1.msra.mxu0 %v154
    %267 = vmatprep.subr.mxu0 %v159
    %268 = vmatpush1.msra.mxu0 %v158
    %269 = vmatprep.subr.mxu0 %v163
    %270 = vmatpush1.msra.mxu0 %v162
    %271 = vmatprep.subr.mxu0 %v167
    %272 = vmatpush1.msra.mxu0 %v166
    %273 = vmatprep.subr.mxu0 0.0
    %274 = vmatpush1.msra.mxu0 0.0
    %275 = vmatprep.subr.mxu0 0.0
    %276 = vmatpush1.msra.mxu0 0.0
    %277 = vmatprep.subr.mxu0 0.0
    %278 = vmatpush1.msra.mxu0 0.0
    %279 = vmatprep.subr.mxu0 0.0
    %280 = vmatpush1.msra.mxu0 0.0
    %281 = vmatprep.subr.mxu0 0.0
    %282 = vmatpush1.msra.mxu0 0.0
    %283 = vmatprep.subr.mxu0 0.0
    %284 = vmatpush1.msra.mxu0 0.0
    %285 = vmatprep.subr.mxu0 0.0
    %286 = vmatpush1.msra.mxu0 0.0
    %287 = vmatprep.subr.mxu0 0.0
    %288 = vmatpush1.msra.mxu0 0.0
    %289 = vmatprep.subr.mxu0 0.0
    %290 = vmatpush1.msra.mxu0 0.0
    %291 = vmatprep.subr.mxu0 0.0
    %292 = vmatpush1.msra.mxu0 0.0
    %293 = vmatprep.subr.mxu0 0.0
    %294 = vmatpush1.msra.mxu0 0.0
    %295 = vmatprep.subr.mxu0 0.0
    %296 = vmatpush1.msra.mxu0 0.0
    %297 = vmatprep.subr.mxu0 0.0
    %298 = vmatpush1.msra.mxu0 0.0
    %299 = vmatprep.subr.mxu0 0.0
    %300 = vmatpush1.msra.mxu0 0.0
    %301 = vmatprep.subr.mxu0 0.0
    %302 = vmatpush1.msra.mxu0 0.0
    %303 = vmatprep.subr.mxu0 0.0
    %304 = vmatpush1.msra.mxu0 0.0
    %305 = vmatprep.subr.mxu0 0.0
    %306 = vmatpush1.msra.mxu0 0.0
    %307 = vmatprep.subr.mxu0 0.0
    %308 = vmatpush1.msra.mxu0 0.0
    %309 = vmatprep.subr.mxu0 0.0
    %310 = vmatpush1.msra.mxu0 0.0
    %311 = vmatprep.subr.mxu0 0.0
    %312 = vmatpush1.msra.mxu0 0.0
    %313 = vmatprep.subr.mxu0 0.0
    %314 = vmatpush1.msra.mxu0 0.0
    %315 = vmatprep.subr.mxu0 0.0
    %316 = vmatpush1.msra.mxu0 0.0
    %317 = vmatprep.subr.mxu0 0.0
    %318 = vmatpush1.msra.mxu0 0.0
    %319 = vmatprep.subr.mxu0 0.0
    %320 = vmatpush1.msra.mxu0 0.0
    %321 = vmatprep.subr.mxu0 0.0
    %322 = vmatpush1.msra.mxu0 0.0
    %323 = vmatprep.subr.mxu0 0.0
    %324 = vmatpush1.msra.mxu0 0.0
    %325 = vmatprep.subr.mxu0 0.0
    %326 = vmatpush1.msra.mxu0 0.0
    %327 = vmatprep.subr.mxu0 0.0
    %328 = vmatpush1.msra.mxu0 0.0
    %329 = vmatprep.mubr.f32.mxu0 0.0
    %330 = vmatmul.mubr.f32.gmra.mrb[0].mxu0 %v192
    %v331 = vpop.f32.mrb[0].mxu0
    %v332 = vadd.f32 %v181, %v331
    %v333 = vpop.f32.mrb[0].mxu0
    %v334 = vadd.f32 %v185, %v333
    %335 = vdwg.mxu0
    %336 = vst [vmem:[#allocation2] sm:$0xff] %v261
    %337 = vst [vmem:[#allocation2 + $0x8] sm:$0xff] %v263
    %338 = vst [vmem:[#allocation2 + $0x10] sm:$0xff] %v332
    %339 = vst [vmem:[#allocation2 + $0x18] sm:$0xff] %v334
    %v340 = vld [vmem:[#allocation2] ss:$8 sm:$0xf]
    %v341 = vld [vmem:[#allocation11] sm:$0xff]
    %v342 = vld [vmem:[#allocation11 + $0x8] sm:$0xff]
    %v343 = vld [vmem:[#allocation11 + $0x10] sm:$0xff]
    %v344 = vld [vmem:[#allocation11 + $0x18] sm:$0xff]
    %v345 = vld [vmem:[#allocation11 + $0x20] sm:$0xff]
    %v346 = vld [vmem:[#allocation11 + $0x28] sm:$0xff]
    %v347 = vld [vmem:[#allocation11 + $0x30] sm:$0xff]
    %v348 = vld [vmem:[#allocation11 + $0x38] sm:$0xff]
    %v349 = vld [vmem:[#allocation11 + $0x40] sm:$0xff]
    %v350 = vld [vmem:[#allocation11 + $0x48] sm:$0xff]
    %v351 = vld [vmem:[#allocation11 + $0x50] sm:$0xff]
    %v352 = vld [vmem:[#allocation11 + $0x58] sm:$0xff]
    %v353 = vld [vmem:[#allocation11 + $0x60] sm:$0xff]
    %v354 = vld [vmem:[#allocation11 + $0x68] sm:$0xff]
    %v355 = vld [vmem:[#allocation11 + $0x70] sm:$0xff]
    %v356 = vld [vmem:[#allocation11 + $0x78] sm:$0xff]
    %v358 = vsel %vm190, 0.0, 0
    %360 = vmatprep.subr.mxu0 %v342
    %361 = vmatpush1.msra.mxu0 %v341
    %362 = vmatprep.subr.mxu0 %v346
    %363 = vmatpush1.msra.mxu0 %v345
    %364 = vmatprep.subr.mxu0 %v350
    %365 = vmatpush1.msra.mxu0 %v349
    %366 = vmatprep.subr.mxu0 %v354
    %367 = vmatpush1.msra.mxu0 %v353
    %368 = vmatprep.subr.mxu0 0.0
    %369 = vmatpush1.msra.mxu0 0.0
    %370 = vmatprep.subr.mxu0 0.0
    %371 = vmatpush1.msra.mxu0 0.0
    %372 = vmatprep.subr.mxu0 0.0
    %373 = vmatpush1.msra.mxu0 0.0
    %374 = vmatprep.subr.mxu0 0.0
    %375 = vmatpush1.msra.mxu0 0.0
    %376 = vmatprep.subr.mxu0 0.0
    %377 = vmatpush1.msra.mxu0 0.0
    %378 = vmatprep.subr.mxu0 0.0
    %379 = vmatpush1.msra.mxu0 0.0
    %380 = vmatprep.subr.mxu0 0.0
    %381 = vmatpush1.msra.mxu0 0.0
    %382 = vmatprep.subr.mxu0 0.0
    %383 = vmatpush1.msra.mxu0 0.0
    %384 = vmatprep.subr.mxu0 0.0
    %385 = vmatpush1.msra.mxu0 0.0
    %386 = vmatprep.subr.mxu0 0.0
    %387 = vmatpush1.msra.mxu0 0.0
    %388 = vmatprep.subr.mxu0 0.0
    %389 = vmatpush1.msra.mxu0 0.0
    %390 = vmatprep.subr.mxu0 0.0
    %391 = vmatpush1.msra.mxu0 0.0
    %392 = vmatprep.subr.mxu0 0.0
    %393 = vmatpush1.msra.mxu0 0.0
    %394 = vmatprep.subr.mxu0 0.0
    %395 = vmatpush1.msra.mxu0 0.0
    %396 = vmatprep.subr.mxu0 0.0
    %397 = vmatpush1.msra.mxu0 0.0
    %398 = vmatprep.subr.mxu0 0.0
    %399 = vmatpush1.msra.mxu0 0.0
    %400 = vmatprep.subr.mxu0 0.0
    %401 = vmatpush1.msra.mxu0 0.0
    %402 = vmatprep.subr.mxu0 0.0
    %403 = vmatpush1.msra.mxu0 0.0
    %404 = vmatprep.subr.mxu0 0.0
    %405 = vmatpush1.msra.mxu0 0.0
    %406 = vmatprep.subr.mxu0 0.0
    %407 = vmatpush1.msra.mxu0 0.0
    %408 = vmatprep.subr.mxu0 0.0
    %409 = vmatpush1.msra.mxu0 0.0
    %410 = vmatprep.subr.mxu0 0.0
    %411 = vmatpush1.msra.mxu0 0.0
    %412 = vmatprep.subr.mxu0 0.0
    %413 = vmatpush1.msra.mxu0 0.0
    %414 = vmatprep.subr.mxu0 0.0
    %415 = vmatpush1.msra.mxu0 0.0
    %416 = vmatprep.subr.mxu0 0.0
    %417 = vmatpush1.msra.mxu0 0.0
    %418 = vmatprep.subr.mxu0 0.0
    %419 = vmatpush1.msra.mxu0 0.0
    %420 = vmatprep.subr.mxu0 0.0
    %421 = vmatpush1.msra.mxu0 0.0
    %422 = vmatprep.subr.mxu0 0.0
    %423 = vmatpush1.msra.mxu0 0.0
    %424 = vmatprep.mubr.f32.mxu0 0.0
    %425 = vmatmul.mubr.f32.gmra.mrb[0].mxu0 %v358
    %v426 = vpop.f32.mrb[0].mxu0
    %v427 = vadd.f32 0.0, %v426
    %v428 = vpop.f32.mrb[0].mxu0
    %v429 = vadd.f32 0.0, %v428
    %430 = vdwg.mxu0
    %431 = vmatprep.subr.mxu0 %v344
    %432 = vmatpush1.msra.mxu0 %v343
    %433 = vmatprep.subr.mxu0 %v348
    %434 = vmatpush1.msra.mxu0 %v347
    %435 = vmatprep.subr.mxu0 %v352
    %436 = vmatpush1.msra.mxu0 %v351
    %437 = vmatprep.subr.mxu0 %v356
    %438 = vmatpush1.msra.mxu0 %v355
    %439 = vmatprep.subr.mxu0 0.0
    %440 = vmatpush1.msra.mxu0 0.0
    %441 = vmatprep.subr.mxu0 0.0
    %442 = vmatpush1.msra.mxu0 0.0
    %443 = vmatprep.subr.mxu0 0.0
    %444 = vmatpush1.msra.mxu0 0.0
    %445 = vmatprep.subr.mxu0 0.0
    %446 = vmatpush1.msra.mxu0 0.0
    %447 = vmatprep.subr.mxu0 0.0
    %448 = vmatpush1.msra.mxu0 0.0
    %449 = vmatprep.subr.mxu0 0.0
    %450 = vmatpush1.msra.mxu0 0.0
    %451 = vmatprep.subr.mxu0 0.0
    %452 = vmatpush1.msra.mxu0 0.0
    %453 = vmatprep.subr.mxu0 0.0
    %454 = vmatpush1.msra.mxu0 0.0
    %455 = vmatprep.subr.mxu0 0.0
    %456 = vmatpush1.msra.mxu0 0.0
    %457 = vmatprep.subr.mxu0 0.0
    %458 = vmatpush1.msra.mxu0 0.0
    %459 = vmatprep.subr.mxu0 0.0
    %460 = vmatpush1.msra.mxu0 0.0
    %461 = vmatprep.subr.mxu0 0.0
    %462 = vmatpush1.msra.mxu0 0.0
    %463 = vmatprep.subr.mxu0 0.0
    %464 = vmatpush1.msra.mxu0 0.0
    %465 = vmatprep.subr.mxu0 0.0
    %466 = vmatpush1.msra.mxu0 0.0
    %467 = vmatprep.subr.mxu0 0.0
    %468 = vmatpush1.msra.mxu0 0.0
    %469 = vmatprep.subr.mxu0 0.0
    %470 = vmatpush1.msra.mxu0 0.0
    %471 = vmatprep.subr.mxu0 0.0
    %472 = vmatpush1.msra.mxu0 0.0
    %473 = vmatprep.subr.mxu0 0.0
    %474 = vmatpush1.msra.mxu0 0.0
    %475 = vmatprep.subr.mxu0 0.0
    %476 = vmatpush1.msra.mxu0 0.0
    %477 = vmatprep.subr.mxu0 0.0
    %478 = vmatpush1.msra.mxu0 0.0
    %479 = vmatprep.subr.mxu0 0.0
    %480 = vmatpush1.msra.mxu0 0.0
    %481 = vmatprep.subr.mxu0 0.0
    %482 = vmatpush1.msra.mxu0 0.0
    %483 = vmatprep.subr.mxu0 0.0
    %484 = vmatpush1.msra.mxu0 0.0
    %485 = vmatprep.subr.mxu0 0.0
    %486 = vmatpush1.msra.mxu0 0.0
    %487 = vmatprep.subr.mxu0 0.0
    %488 = vmatpush1.msra.mxu0 0.0
    %489 = vmatprep.subr.mxu0 0.0
    %490 = vmatpush1.msra.mxu0 0.0
    %491 = vmatprep.subr.mxu0 0.0
    %492 = vmatpush1.msra.mxu0 0.0
    %493 = vmatprep.subr.mxu0 0.0
    %494 = vmatpush1.msra.mxu0 0.0
    %495 = vmatprep.mubr.f32.mxu0 0.0
    %496 = vmatmul.mubr.f32.gmra.mrb[0].mxu0 %v358
    %v497 = vpop.f32.mrb[0].mxu0
    %v498 = vadd.f32 0.0, %v497
    %v499 = vpop.f32.mrb[0].mxu0
    %v500 = vadd.f32 0.0, %v499
    %501 = vdwg.mxu0
    %v506 = vcombine.low %v427, %v429
    %v507 = vcombine.low %v498, %v500
    %v509 = vunpack.c.l.s4 1966171168
    %v510 = vunpack.c.0.s8 %v509
    %v511 = vlaneseq
    %v512 = vshrl.u32 %v511, 7
    %v513 = vsub.s32 %v510, %v512
    %v514 = vrot.slane %v506, %v513
    %v516 = vunpack.c.l.s4 1966171168
    %v517 = vunpack.c.0.s8 %v516
    %v518 = vlaneseq
    %v519 = vshrl.u32 %v518, 7
    %v520 = vsub.s32 %v517, %v519
    %v521 = vrot.slane %v507, %v520
    %v522 = vcombine.low %v514, %v521
    %v524 = vunpack.c.l.s4 1966171168
    %v525 = vunpack.c.0.s8 %v524
    %v526 = vlaneseq
    %v527 = vshrl.u32 %v526, 7
    %v528 = vsub.s32 %v525, %v527
    %v529 = vrot.slane %v522, %v528
    %v531 = vadd.f32 %v340, %v529
    %v532 = vmul.f32 %v531, 0.5
    %v533 = vtanh.pop %v532
    %v534 = vadd.f32 %v533, 1.0
    %v535 = vmul.f32 %v534, 0.5
    %v537 = vrot.slane %v531, 3
    %v539 = vtanh.pop %v537
    %v541 = vrot.slane %v535, 1
    %v543 = vmul.f32 %v541, 0.0
    %v544 = vmul.f32 %v535, %v539
    %v545 = vadd.f32 %v543, %v544
    %v546 = vtanh.pop %v545
    %v547 = vrot.slane %v535, 2
    %v549 = vmul.f32 %v547, %v546
    %550 = vst [vmem:[#allocation3] sm:$0x1] %v549
    %s551 = scalar_lea.vmem [#allocation2], 1
    %v552 = vld [vmem:[%s551] ss:$8 sm:$0xf]
    %v553 = vld [vmem:[#allocation11] sm:$0xff]
    %v554 = vld [vmem:[#allocation11 + $0x8] sm:$0xff]
    %v555 = vld [vmem:[#allocation11 + $0x10] sm:$0xff]
    %v556 = vld [vmem:[#allocation11 + $0x18] sm:$0xff]
    %v557 = vld [vmem:[#allocation11 + $0x20] sm:$0xff]
    %v558 = vld [vmem:[#allocation11 + $0x28] sm:$0xff]
    %v559 = vld [vmem:[#allocation11 + $0x30] sm:$0xff]
    %v560 = vld [vmem:[#allocation11 + $0x38] sm:$0xff]
    %v561 = vld [vmem:[#allocation11 + $0x40] sm:$0xff]
    %v562 = vld [vmem:[#allocation11 + $0x48] sm:$0xff]
    %v563 = vld [vmem:[#allocation11 + $0x50] sm:$0xff]
    %v564 = vld [vmem:[#allocation11 + $0x58] sm:$0xff]
    %v565 = vld [vmem:[#allocation11 + $0x60] sm:$0xff]
    %v566 = vld [vmem:[#allocation11 + $0x68] sm:$0xff]
    %v567 = vld [vmem:[#allocation11 + $0x70] sm:$0xff]
    %v568 = vld [vmem:[#allocation11 + $0x78] sm:$0xff]
    %v570 = vsel %vm190, %v549, 0
    %572 = vmatprep.subr.mxu0 %v554
    %573 = vmatpush1.msra.mxu0 %v553
    %574 = vmatprep.subr.mxu0 %v558
    %575 = vmatpush1.msra.mxu0 %v557
    %576 = vmatprep.subr.mxu0 %v562
    %577 = vmatpush1.msra.mxu0 %v561
    %578 = vmatprep.subr.mxu0 %v566
    %579 = vmatpush1.msra.mxu0 %v565
    %580 = vmatprep.subr.mxu0 0.0
    %581 = vmatpush1.msra.mxu0 0.0
    %582 = vmatprep.subr.mxu0 0.0
    %583 = vmatpush1.msra.mxu0 0.0
    %584 = vmatprep.subr.mxu0 0.0
    %585 = vmatpush1.msra.mxu0 0.0
    %586 = vmatprep.subr.mxu0 0.0
    %587 = vmatpush1.msra.mxu0 0.0
    %588 = vmatprep.subr.mxu0 0.0
    %589 = vmatpush1.msra.mxu0 0.0
    %590 = vmatprep.subr.mxu0 0.0
    %591 = vmatpush1.msra.mxu0 0.0
    %592 = vmatprep.subr.mxu0 0.0
    %593 = vmatpush1.msra.mxu0 0.0
    %594 = vmatprep.subr.mxu0 0.0
    %595 = vmatpush1.msra.mxu0 0.0
    %596 = vmatprep.subr.mxu0 0.0
    %597 = vmatpush1.msra.mxu0 0.0
    %598 = vmatprep.subr.mxu0 0.0
    %599 = vmatpush1.msra.mxu0 0.0
    %600 = vmatprep.subr.mxu0 0.0
    %601 = vmatpush1.msra.mxu0 0.0
    %602 = vmatprep.subr.mxu0 0.0
    %603 = vmatpush1.msra.mxu0 0.0
    %604 = vmatprep.subr.mxu0 0.0
    %605 = vmatpush1.msra.mxu0 0.0
    %606 = vmatprep.subr.mxu0 0.0
    %607 = vmatpush1.msra.mxu0 0.0
    %608 = vmatprep.subr.mxu0 0.0
    %609 = vmatpush1.msra.mxu0 0.0
    %610 = vmatprep.subr.mxu0 0.0
    %611 = vmatpush1.msra.mxu0 0.0
    %612 = vmatprep.subr.mxu0 0.0
    %613 = vmatpush1.msra.mxu0 0.0
    %614 = vmatprep.subr.mxu0 0.0
    %615 = vmatpush1.msra.mxu0 0.0
    %616 = vmatprep.subr.mxu0 0.0
    %617 = vmatpush1.msra.mxu0 0.0
    %618 = vmatprep.subr.mxu0 0.0
    %619 = vmatpush1.msra.mxu0 0.0
    %620 = vmatprep.subr.mxu0 0.0
    %621 = vmatpush1.msra.mxu0 0.0
    %622 = vmatprep.subr.mxu0 0.0
    %623 = vmatpush1.msra.mxu0 0.0
    %624 = vmatprep.subr.mxu0 0.0
    %625 = vmatpush1.msra.mxu0 0.0
    %626 = vmatprep.subr.mxu0 0.0
    %627 = vmatpush1.msra.mxu0 0.0
    %628 = vmatprep.subr.mxu0 0.0
    %629 = vmatpush1.msra.mxu0 0.0
    %630 = vmatprep.subr.mxu0 0.0
    %631 = vmatpush1.msra.mxu0 0.0
    %632 = vmatprep.subr.mxu0 0.0
    %633 = vmatpush1.msra.mxu0 0.0
    %634 = vmatprep.subr.mxu0 0.0
    %635 = vmatpush1.msra.mxu0 0.0
    %636 = vmatprep.mubr.f32.mxu0 0.0
    %637 = vmatmul.mubr.f32.gmra.mrb[0].mxu0 %v570
    %v638 = vpop.f32.mrb[0].mxu0
    %v639 = vadd.f32 0.0, %v638
    %v640 = vpop.f32.mrb[0].mxu0
    %v641 = vadd.f32 0.0, %v640
    %642 = vdwg.mxu0
    %643 = vmatprep.subr.mxu0 %v556
    %644 = vmatpush1.msra.mxu0 %v555
    %645 = vmatprep.subr.mxu0 %v560
    %646 = vmatpush1.msra.mxu0 %v559
    %647 = vmatprep.subr.mxu0 %v564
    %648 = vmatpush1.msra.mxu0 %v563
    %649 = vmatprep.subr.mxu0 %v568
    %650 = vmatpush1.msra.mxu0 %v567
    %651 = vmatprep.subr.mxu0 0.0
    %652 = vmatpush1.msra.mxu0 0.0
    %653 = vmatprep.subr.mxu0 0.0
    %654 = vmatpush1.msra.mxu0 0.0
    %655 = vmatprep.subr.mxu0 0.0
    %656 = vmatpush1.msra.mxu0 0.0
    %657 = vmatprep.subr.mxu0 0.0
    %658 = vmatpush1.msra.mxu0 0.0
    %659 = vmatprep.subr.mxu0 0.0
    %660 = vmatpush1.msra.mxu0 0.0
    %661 = vmatprep.subr.mxu0 0.0
    %662 = vmatpush1.msra.mxu0 0.0
    %663 = vmatprep.subr.mxu0 0.0
    %664 = vmatpush1.msra.mxu0 0.0
    %665 = vmatprep.subr.mxu0 0.0
    %666 = vmatpush1.msra.mxu0 0.0
    %667 = vmatprep.subr.mxu0 0.0
    %668 = vmatpush1.msra.mxu0 0.0
    %669 = vmatprep.subr.mxu0 0.0
    %670 = vmatpush1.msra.mxu0 0.0
    %671 = vmatprep.subr.mxu0 0.0
    %672 = vmatpush1.msra.mxu0 0.0
    %673 = vmatprep.subr.mxu0 0.0
    %674 = vmatpush1.msra.mxu0 0.0
    %675 = vmatprep.subr.mxu0 0.0
    %676 = vmatpush1.msra.mxu0 0.0
    %677 = vmatprep.subr.mxu0 0.0
    %678 = vmatpush1.msra.mxu0 0.0
    %679 = vmatprep.subr.mxu0 0.0
    %680 = vmatpush1.msra.mxu0 0.0
    %681 = vmatprep.subr.mxu0 0.0
    %682 = vmatpush1.msra.mxu0 0.0
    %683 = vmatprep.subr.mxu0 0.0
    %684 = vmatpush1.msra.mxu0 0.0
    %685 = vmatprep.subr.mxu0 0.0
    %686 = vmatpush1.msra.mxu0 0.0
    %687 = vmatprep.subr.mxu0 0.0
    %688 = vmatpush1.msra.mxu0 0.0
    %689 = vmatprep.subr.mxu0 0.0
    %690 = vmatpush1.msra.mxu0 0.0
    %691 = vmatprep.subr.mxu0 0.0
    %692 = vmatpush1.msra.mxu0 0.0
    %693 = vmatprep.subr.mxu0 0.0
    %694 = vmatpush1.msra.mxu0 0.0
    %695 = vmatprep.subr.mxu0 0.0
    %696 = vmatpush1.msra.mxu0 0.0
    %697 = vmatprep.subr.mxu0 0.0
    %698 = vmatpush1.msra.mxu0 0.0
    %699 = vmatprep.subr.mxu0 0.0
    %700 = vmatpush1.msra.mxu0 0.0
    %701 = vmatprep.subr.mxu0 0.0
    %702 = vmatpush1.msra.mxu0 0.0
    %703 = vmatprep.subr.mxu0 0.0
    %704 = vmatpush1.msra.mxu0 0.0
    %705 = vmatprep.subr.mxu0 0.0
    %706 = vmatpush1.msra.mxu0 0.0
    %707 = vmatprep.mubr.f32.mxu0 0.0
    %708 = vmatmul.mubr.f32.gmra.mrb[0].mxu0 %v570
    %v709 = vpop.f32.mrb[0].mxu0
    %v710 = vadd.f32 0.0, %v709
    %v711 = vpop.f32.mrb[0].mxu0
    %v712 = vadd.f32 0.0, %v711
    %713 = vdwg.mxu0
    %v718 = vcombine.low %v639, %v641
    %v719 = vcombine.low %v710, %v712
    %v721 = vunpack.c.l.s4 1966171168
    %v722 = vunpack.c.0.s8 %v721
    %v723 = vlaneseq
    %v724 = vshrl.u32 %v723, 7
    %v725 = vsub.s32 %v722, %v724
    %v726 = vrot.slane %v718, %v725
    %v728 = vunpack.c.l.s4 1966171168
    %v729 = vunpack.c.0.s8 %v728
    %v730 = vlaneseq
    %v731 = vshrl.u32 %v730, 7
    %v732 = vsub.s32 %v729, %v731
    %v733 = vrot.slane %v719, %v732
    %v734 = vcombine.low %v726, %v733
    %v736 = vunpack.c.l.s4 1966171168
    %v737 = vunpack.c.0.s8 %v736
    %v738 = vlaneseq
    %v739 = vshrl.u32 %v738, 7
    %v740 = vsub.s32 %v737, %v739
    %v741 = vrot.slane %v734, %v740
    %v743 = vadd.f32 %v552, %v741
    %v744 = vmul.f32 %v743, 0.5
    %v745 = vtanh.pop %v744
    %v746 = vadd.f32 %v745, 1.0
    %v747 = vmul.f32 %v746, 0.5
    %v749 = vrot.slane %v743, 3
    %v751 = vtanh.pop %v749
    %v753 = vrot.slane %v747, 1
    %v755 = vmul.f32 %v753, %v545
    %v756 = vmul.f32 %v747, %v751
    %v757 = vadd.f32 %v755, %v756
    %v758 = vtanh.pop %v757
    %v759 = vrot.slane %v747, 2
    %v761 = vmul.f32 %v759, %v758
    %762 = vst [vmem:[#allocation3 + $0x1] sm:$0x1] %v761
    %s763 = scalar_lea.vmem [#allocation2], 2
    %v764 = vld [vmem:[%s763] ss:$8 sm:$0xf]
    %v765 = vld [vmem:[#allocation11] sm:$0xff]
    %v766 = vld [vmem:[#allocation11 + $0x8] sm:$0xff]
    %v767 = vld [vmem:[#allocation11 + $0x10] sm:$0xff]
    %v768 = vld [vmem:[#allocation11 + $0x18] sm:$0xff]
    %v769 = vld [vmem:[#allocation11 + $0x20] sm:$0xff]
    %v770 = vld [vmem:[#allocation11 + $0x28] sm:$0xff]
    %v771 = vld [vmem:[#allocation11 + $0x30] sm:$0xff]
    %v772 = vld [vmem:[#allocation11 + $0x38] sm:$0xff]
    %v773 = vld [vmem:[#allocation11 + $0x40] sm:$0xff]
    %v774 = vld [vmem:[#allocation11 + $0x48] sm:$0xff]
    %v775 = vld [vmem:[#allocation11 + $0x50] sm:$0xff]
    %v776 = vld [vmem:[#allocation11 + $0x58] sm:$0xff]
    %v777 = vld [vmem:[#allocation11 + $0x60] sm:$0xff]
    %v778 = vld [vmem:[#allocation11 + $0x68] sm:$0xff]
    %v779 = vld [vmem:[#allocation11 + $0x70] sm:$0xff]
    %v780 = vld [vmem:[#allocation11 + $0x78] sm:$0xff]
    %v782 = vsel %vm190, %v761, 0
    %784 = vmatprep.subr.mxu0 %v766
    %785 = vmatpush1.msra.mxu0 %v765
    %786 = vmatprep.subr.mxu0 %v770
    %787 = vmatpush1.msra.mxu0 %v769
    %788 = vmatprep.subr.mxu0 %v774
    %789 = vmatpush1.msra.mxu0 %v773
    %790 = vmatprep.subr.mxu0 %v778
    %791 = vmatpush1.msra.mxu0 %v777
    %792 = vmatprep.subr.mxu0 0.0
    %793 = vmatpush1.msra.mxu0 0.0
    %794 = vmatprep.subr.mxu0 0.0
    %795 = vmatpush1.msra.mxu0 0.0
    %796 = vmatprep.subr.mxu0 0.0
    %797 = vmatpush1.msra.mxu0 0.0
    %798 = vmatprep.subr.mxu0 0.0
    %799 = vmatpush1.msra.mxu0 0.0
    %800 = vmatprep.subr.mxu0 0.0
    %801 = vmatpush1.msra.mxu0 0.0
    %802 = vmatprep.subr.mxu0 0.0
    %803 = vmatpush1.msra.mxu0 0.0
    %804 = vmatprep.subr.mxu0 0.0
    %805 = vmatpush1.msra.mxu0 0.0
    %806 = vmatprep.subr.mxu0 0.0
    %807 = vmatpush1.msra.mxu0 0.0
    %808 = vmatprep.subr.mxu0 0.0
    %809 = vmatpush1.msra.mxu0 0.0
    %810 = vmatprep.subr.mxu0 0.0
    %811 = vmatpush1.msra.mxu0 0.0
    %812 = vmatprep.subr.mxu0 0.0
    %813 = vmatpush1.msra.mxu0 0.0
    %814 = vmatprep.subr.mxu0 0.0
    %815 = vmatpush1.msra.mxu0 0.0
    %816 = vmatprep.subr.mxu0 0.0
    %817 = vmatpush1.msra.mxu0 0.0
    %818 = vmatprep.subr.mxu0 0.0
    %819 = vmatpush1.msra.mxu0 0.0
    %820 = vmatprep.subr.mxu0 0.0
    %821 = vmatpush1.msra.mxu0 0.0
    %822 = vmatprep.subr.mxu0 0.0
    %823 = vmatpush1.msra.mxu0 0.0
    %824 = vmatprep.subr.mxu0 0.0
    %825 = vmatpush1.msra.mxu0 0.0
    %826 = vmatprep.subr.mxu0 0.0
    %827 = vmatpush1.msra.mxu0 0.0
    %828 = vmatprep.subr.mxu0 0.0
    %829 = vmatpush1.msra.mxu0 0.0
    %830 = vmatprep.subr.mxu0 0.0
    %831 = vmatpush1.msra.mxu0 0.0
    %832 = vmatprep.subr.mxu0 0.0
    %833 = vmatpush1.msra.mxu0 0.0
    %834 = vmatprep.subr.mxu0 0.0
    %835 = vmatpush1.msra.mxu0 0.0
    %836 = vmatprep.subr.mxu0 0.0
    %837 = vmatpush1.msra.mxu0 0.0
    %838 = vmatprep.subr.mxu0 0.0
    %839 = vmatpush1.msra.mxu0 0.0
    %840 = vmatprep.subr.mxu0 0.0
    %841 = vmatpush1.msra.mxu0 0.0
    %842 = vmatprep.subr.mxu0 0.0
    %843 = vmatpush1.msra.mxu0 0.0
    %844 = vmatprep.subr.mxu0 0.0
    %845 = vmatpush1.msra.mxu0 0.0
    %846 = vmatprep.subr.mxu0 0.0
    %847 = vmatpush1.msra.mxu0 0.0
    %848 = vmatprep.mubr.f32.mxu0 0.0
    %849 = vmatmul.mubr.f32.gmra.mrb[0].mxu0 %v782
    %v850 = vpop.f32.mrb[0].mxu0
    %v851 = vadd.f32 0.0, %v850
    %v852 = vpop.f32.mrb[0].mxu0
    %v853 = vadd.f32 0.0, %v852
    %854 = vdwg.mxu0
    %855 = vmatprep.subr.mxu0 %v768
    %856 = vmatpush1.msra.mxu0 %v767
    %857 = vmatprep.subr.mxu0 %v772
    %858 = vmatpush1.msra.mxu0 %v771
    %859 = vmatprep.subr.mxu0 %v776
    %860 = vmatpush1.msra.mxu0 %v775
    %861 = vmatprep.subr.mxu0 %v780
    %862 = vmatpush1.msra.mxu0 %v779
    %863 = vmatprep.subr.mxu0 0.0
    %864 = vmatpush1.msra.mxu0 0.0
    %865 = vmatprep.subr.mxu0 0.0
    %866 = vmatpush1.msra.mxu0 0.0
    %867 = vmatprep.subr.mxu0 0.0
    %868 = vmatpush1.msra.mxu0 0.0
    %869 = vmatprep.subr.mxu0 0.0
    %870 = vmatpush1.msra.mxu0 0.0
    %871 = vmatprep.subr.mxu0 0.0
    %872 = vmatpush1.msra.mxu0 0.0
    %873 = vmatprep.subr.mxu0 0.0
    %874 = vmatpush1.msra.mxu0 0.0
    %875 = vmatprep.subr.mxu0 0.0
    %876 = vmatpush1.msra.mxu0 0.0
    %877 = vmatprep.subr.mxu0 0.0
    %878 = vmatpush1.msra.mxu0 0.0
    %879 = vmatprep.subr.mxu0 0.0
    %880 = vmatpush1.msra.mxu0 0.0
    %881 = vmatprep.subr.mxu0 0.0
    %882 = vmatpush1.msra.mxu0 0.0
    %883 = vmatprep.subr.mxu0 0.0
    %884 = vmatpush1.msra.mxu0 0.0
    %885 = vmatprep.subr.mxu0 0.0
    %886 = vmatpush1.msra.mxu0 0.0
    %887 = vmatprep.subr.mxu0 0.0
    %888 = vmatpush1.msra.mxu0 0.0
    %889 = vmatprep.subr.mxu0 0.0
    %890 = vmatpush1.msra.mxu0 0.0
    %891 = vmatprep.subr.mxu0 0.0
    %892 = vmatpush1.msra.mxu0 0.0
    %893 = vmatprep.subr.mxu0 0.0
    %894 = vmatpush1.msra.mxu0 0.0
    %895 = vmatprep.subr.mxu0 0.0
    %896 = vmatpush1.msra.mxu0 0.0
    %897 = vmatprep.subr.mxu0 0.0
    %898 = vmatpush1.msra.mxu0 0.0
    %899 = vmatprep.subr.mxu0 0.0
    %900 = vmatpush1.msra.mxu0 0.0
    %901 = vmatprep.subr.mxu0 0.0
    %902 = vmatpush1.msra.mxu0 0.0
    %903 = vmatprep.subr.mxu0 0.0
    %904 = vmatpush1.msra.mxu0 0.0
    %905 = vmatprep.subr.mxu0 0.0
    %906 = vmatpush1.msra.mxu0 0.0
    %907 = vmatprep.subr.mxu0 0.0
    %908 = vmatpush1.msra.mxu0 0.0
    %909 = vmatprep.subr.mxu0 0.0
    %910 = vmatpush1.msra.mxu0 0.0
    %911 = vmatprep.subr.mxu0 0.0
    %912 = vmatpush1.msra.mxu0 0.0
    %913 = vmatprep.subr.mxu0 0.0
    %914 = vmatpush1.msra.mxu0 0.0
    %915 = vmatprep.subr.mxu0 0.0
    %916 = vmatpush1.msra.mxu0 0.0
    %917 = vmatprep.subr.mxu0 0.0
    %918 = vmatpush1.msra.mxu0 0.0
    %919 = vmatprep.mubr.f32.mxu0 0.0
    %920 = vmatmul.mubr.f32.gmra.mrb[0].mxu0 %v782
    %v921 = vpop.f32.mrb[0].mxu0
    %v922 = vadd.f32 0.0, %v921
    %v923 = vpop.f32.mrb[0].mxu0
    %v924 = vadd.f32 0.0, %v923
    %925 = vdwg.mxu0
    %v930 = vcombine.low %v851, %v853
    %v931 = vcombine.low %v922, %v924
    %v933 = vunpack.c.l.s4 1966171168
    %v934 = vunpack.c.0.s8 %v933
    %v935 = vlaneseq
    %v936 = vshrl.u32 %v935, 7
    %v937 = vsub.s32 %v934, %v936
    %v938 = vrot.slane %v930, %v937
    %v940 = vunpack.c.l.s4 1966171168
    %v941 = vunpack.c.0.s8 %v940
    %v942 = vlaneseq
    %v943 = vshrl.u32 %v942, 7
    %v944 = vsub.s32 %v941, %v943
    %v945 = vrot.slane %v931, %v944
    %v946 = vcombine.low %v938, %v945
    %v948 = vunpack.c.l.s4 1966171168
    %v949 = vunpack.c.0.s8 %v948
    %v950 = vlaneseq
    %v951 = vshrl.u32 %v950, 7
    %v952 = vsub.s32 %v949, %v951
    %v953 = vrot.slane %v946, %v952
    %v955 = vadd.f32 %v764, %v953
    %v956 = vmul.f32 %v955, 0.5
    %v957 = vtanh.pop %v956
    %v958 = vadd.f32 %v957, 1.0
    %v959 = vmul.f32 %v958, 0.5
    %v961 = vrot.slane %v955, 3
    %v963 = vtanh.pop %v961
    %v965 = vrot.slane %v959, 1
    %v967 = vmul.f32 %v965, %v757
    %v968 = vmul.f32 %v959, %v963
    %v969 = vadd.f32 %v967, %v968
    %v970 = vtanh.pop %v969
    %v971 = vrot.slane %v959, 2
    %v973 = vmul.f32 %v971, %v970
    %974 = vst [vmem:[#allocation3 + $0x2] sm:$0x1] %v973
    %s975 = scalar_lea.vmem [#allocation2], 3
    %v976 = vld [vmem:[%s975] ss:$8 sm:$0xf]
    %v977 = vld [vmem:[#allocation11] sm:$0xff]
    %v978 = vld [vmem:[#allocation11 + $0x8] sm:$0xff]
    %v979 = vld [vmem:[#allocation11 + $0x10] sm:$0xff]
    %v980 = vld [vmem:[#allocation11 + $0x18] sm:$0xff]
    %v981 = vld [vmem:[#allocation11 + $0x20] sm:$0xff]
    %v982 = vld [vmem:[#allocation11 + $0x28] sm:$0xff]
    %v983 = vld [vmem:[#allocation11 + $0x30] sm:$0xff]
    %v984 = vld [vmem:[#allocation11 + $0x38] sm:$0xff]
    %v985 = vld [vmem:[#allocation11 + $0x40] sm:$0xff]
    %v986 = vld [vmem:[#allocation11 + $0x48] sm:$0xff]
    %v987 = vld [vmem:[#allocation11 + $0x50] sm:$0xff]
    %v988 = vld [vmem:[#allocation11 + $0x58] sm:$0xff]
    %v989 = vld [vmem:[#allocation11 + $0x60] sm:$0xff]
    %v990 = vld [vmem:[#allocation11 + $0x68] sm:$0xff]
    %v991 = vld [vmem:[#allocation11 + $0x70] sm:$0xff]
    %v992 = vld [vmem:[#allocation11 + $0x78] sm:$0xff]
    %v994 = vsel %vm190, %v973, 0
    %996 = vmatprep.subr.mxu0 %v978
    %997 = vmatpush1.msra.mxu0 %v977
    %998 = vmatprep.subr.mxu0 %v982
    %999 = vmatpush1.msra.mxu0 %v981
    %1000 = vmatprep.subr.mxu0 %v986
    %1001 = vmatpush1.msra.mxu0 %v985
    %1002 = vmatprep.subr.mxu0 %v990
    %1003 = vmatpush1.msra.mxu0 %v989
    %1004 = vmatprep.subr.mxu0 0.0
    %1005 = vmatpush1.msra.mxu0 0.0
    %1006 = vmatprep.subr.mxu0 0.0
    %1007 = vmatpush1.msra.mxu0 0.0
    %1008 = vmatprep.subr.mxu0 0.0
    %1009 = vmatpush1.msra.mxu0 0.0
    %1010 = vmatprep.subr.mxu0 0.0
    %1011 = vmatpush1.msra.mxu0 0.0
    %1012 = vmatprep.subr.mxu0 0.0
    %1013 = vmatpush1.msra.mxu0 0.0
    %1014 = vmatprep.subr.mxu0 0.0
    %1015 = vmatpush1.msra.mxu0 0.0
    %1016 = vmatprep.subr.mxu0 0.0
    %1017 = vmatpush1.msra.mxu0 0.0
    %1018 = vmatprep.subr.mxu0 0.0
    %1019 = vmatpush1.msra.mxu0 0.0
    %1020 = vmatprep.subr.mxu0 0.0
    %1021 = vmatpush1.msra.mxu0 0.0
    %1022 = vmatprep.subr.mxu0 0.0
    %1023 = vmatpush1.msra.mxu0 0.0
    %1024 = vmatprep.subr.mxu0 0.0
    %1025 = vmatpush1.msra.mxu0 0.0
    %1026 = vmatprep.subr.mxu0 0.0
    %1027 = vmatpush1.msra.mxu0 0.0
    %1028 = vmatprep.subr.mxu0 0.0
    %1029 = vmatpush1.msra.mxu0 0.0
    %1030 = vmatprep.subr.mxu0 0.0
    %1031 = vmatpush1.msra.mxu0 0.0
    %1032 = vmatprep.subr.mxu0 0.0
    %1033 = vmatpush1.msra.mxu0 0.0
    %1034 = vmatprep.subr.mxu0 0.0
    %1035 = vmatpush1.msra.mxu0 0.0
    %1036 = vmatprep.subr.mxu0 0.0
    %1037 = vmatpush1.msra.mxu0 0.0
    %1038 = vmatprep.subr.mxu0 0.0
    %1039 = vmatpush1.msra.mxu0 0.0
    %1040 = vmatprep.subr.mxu0 0.0
    %1041 = vmatpush1.msra.mxu0 0.0
    %1042 = vmatprep.subr.mxu0 0.0
    %1043 = vmatpush1.msra.mxu0 0.0
    %1044 = vmatprep.subr.mxu0 0.0
    %1045 = vmatpush1.msra.mxu0 0.0
    %1046 = vmatprep.subr.mxu0 0.0
    %1047 = vmatpush1.msra.mxu0 0.0
    %1048 = vmatprep.subr.mxu0 0.0
    %1049 = vmatpush1.msra.mxu0 0.0
    %1050 = vmatprep.subr.mxu0 0.0
    %1051 = vmatpush1.msra.mxu0 0.0
    %1052 = vmatprep.subr.mxu0 0.0
    %1053 = vmatpush1.msra.mxu0 0.0
    %1054 = vmatprep.subr.mxu0 0.0
    %1055 = vmatpush1.msra.mxu0 0.0
    %1056 = vmatprep.subr.mxu0 0.0
    %1057 = vmatpush1.msra.mxu0 0.0
    %1058 = vmatprep.subr.mxu0 0.0
    %1059 = vmatpush1.msra.mxu0 0.0
    %1060 = vmatprep.mubr.f32.mxu0 0.0
    %1061 = vmatmul.mubr.f32.gmra.mrb[0].mxu0 %v994
    %v1062 = vpop.f32.mrb[0].mxu0
    %v1063 = vadd.f32 0.0, %v1062
    %v1064 = vpop.f32.mrb[0].mxu0
    %v1065 = vadd.f32 0.0, %v1064
    %1066 = vdwg.mxu0
    %1067 = vmatprep.subr.mxu0 %v980
    %1068 = vmatpush1.msra.mxu0 %v979
    %1069 = vmatprep.subr.mxu0 %v984
    %1070 = vmatpush1.msra.mxu0 %v983
    %1071 = vmatprep.subr.mxu0 %v988
    %1072 = vmatpush1.msra.mxu0 %v987
    %1073 = vmatprep.subr.mxu0 %v992
    %1074 = vmatpush1.msra.mxu0 %v991
    %1075 = vmatprep.subr.mxu0 0.0
    %1076 = vmatpush1.msra.mxu0 0.0
    %1077 = vmatprep.subr.mxu0 0.0
    %1078 = vmatpush1.msra.mxu0 0.0
    %1079 = vmatprep.subr.mxu0 0.0
    %1080 = vmatpush1.msra.mxu0 0.0
    %1081 = vmatprep.subr.mxu0 0.0
    %1082 = vmatpush1.msra.mxu0 0.0
    %1083 = vmatprep.subr.mxu0 0.0
    %1084 = vmatpush1.msra.mxu0 0.0
    %1085 = vmatprep.subr.mxu0 0.0
    %1086 = vmatpush1.msra.mxu0 0.0
    %1087 = vmatprep.subr.mxu0 0.0
    %1088 = vmatpush1.msra.mxu0 0.0
    %1089 = vmatprep.subr.mxu0 0.0
    %1090 = vmatpush1.msra.mxu0 0.0
    %1091 = vmatprep.subr.mxu0 0.0
    %1092 = vmatpush1.msra.mxu0 0.0
    %1093 = vmatprep.subr.mxu0 0.0
    %1094 = vmatpush1.msra.mxu0 0.0
    %1095 = vmatprep.subr.mxu0 0.0
    %1096 = vmatpush1.msra.mxu0 0.0
    %1097 = vmatprep.subr.mxu0 0.0
    %1098 = vmatpush1.msra.mxu0 0.0
    %1099 = vmatprep.subr.mxu0 0.0
    %1100 = vmatpush1.msra.mxu0 0.0
    %1101 = vmatprep.subr.mxu0 0.0
    %1102 = vmatpush1.msra.mxu0 0.0
    %1103 = vmatprep.subr.mxu0 0.0
    %1104 = vmatpush1.msra.mxu0 0.0
    %1105 = vmatprep.subr.mxu0 0.0
    %1106 = vmatpush1.msra.mxu0 0.0
    %1107 = vmatprep.subr.mxu0 0.0
    %1108 = vmatpush1.msra.mxu0 0.0
    %1109 = vmatprep.subr.mxu0 0.0
    %1110 = vmatpush1.msra.mxu0 0.0
    %1111 = vmatprep.subr.mxu0 0.0
    %1112 = vmatpush1.msra.mxu0 0.0
    %1113 = vmatprep.subr.mxu0 0.0
    %1114 = vmatpush1.msra.mxu0 0.0
    %1115 = vmatprep.subr.mxu0 0.0
    %1116 = vmatpush1.msra.mxu0 0.0
    %1117 = vmatprep.subr.mxu0 0.0
    %1118 = vmatpush1.msra.mxu0 0.0
    %1119 = vmatprep.subr.mxu0 0.0
    %1120 = vmatpush1.msra.mxu0 0.0
    %1121 = vmatprep.subr.mxu0 0.0
    %1122 = vmatpush1.msra.mxu0 0.0
    %1123 = vmatprep.subr.mxu0 0.0
    %1124 = vmatpush1.msra.mxu0 0.0
    %1125 = vmatprep.subr.mxu0 0.0
    %1126 = vmatpush1.msra.mxu0 0.0
    %1127 = vmatprep.subr.mxu0 0.0
    %1128 = vmatpush1.msra.mxu0 0.0
    %1129 = vmatprep.subr.mxu0 0.0
    %1130 = vmatpush1.msra.mxu0 0.0
    %1131 = vmatprep.mubr.f32.mxu0 0.0
    %1132 = vmatmul.mubr.f32.gmra.mrb[0].mxu0 %v994
    %v1133 = vpop.f32.mrb[0].mxu0
    %v1134 = vadd.f32 0.0, %v1133
    %v1135 = vpop.f32.mrb[0].mxu0
    %v1136 = vadd.f32 0.0, %v1135
    %1137 = vdwg.mxu0
    %v1142 = vcombine.low %v1063, %v1065
    %v1143 = vcombine.low %v1134, %v1136
    %v1145 = vunpack.c.l.s4 1966171168
    %v1146 = vunpack.c.0.s8 %v1145
    %v1147 = vlaneseq
    %v1148 = vshrl.u32 %v1147, 7
    %v1149 = vsub.s32 %v1146, %v1148
    %v1150 = vrot.slane %v1142, %v1149
    %v1152 = vunpack.c.l.s4 1966171168
    %v1153 = vunpack.c.0.s8 %v1152
    %v1154 = vlaneseq
    %v1155 = vshrl.u32 %v1154, 7
    %v1156 = vsub.s32 %v1153, %v1155
    %v1157 = vrot.slane %v1143, %v1156
    %v1158 = vcombine.low %v1150, %v1157
    %v1160 = vunpack.c.l.s4 1966171168
    %v1161 = vunpack.c.0.s8 %v1160
    %v1162 = vlaneseq
    %v1163 = vshrl.u32 %v1162, 7
    %v1164 = vsub.s32 %v1161, %v1163
    %v1165 = vrot.slane %v1158, %v1164
    %v1167 = vadd.f32 %v976, %v1165
    %v1168 = vmul.f32 %v1167, 0.5
    %v1169 = vtanh.pop %v1168
    %v1170 = vadd.f32 %v1169, 1.0
    %v1171 = vmul.f32 %v1170, 0.5
    %v1173 = vrot.slane %v1167, 3
    %v1175 = vtanh.pop %v1173
    %v1177 = vrot.slane %v1171, 1
    %v1179 = vmul.f32 %v1177, %v969
    %v1180 = vmul.f32 %v1171, %v1175
    %v1181 = vadd.f32 %v1179, %v1180
    %v1182 = vtanh.pop %v1181
    %v1183 = vrot.slane %v1171, 2
    %v1185 = vmul.f32 %v1183, %v1182
    %1186 = vst [vmem:[#allocation3 + $0x3] sm:$0x1] %v1185
    %s1187 = scalar_lea.vmem [#allocation2], 4
    %v1188 = vld [vmem:[%s1187] ss:$8 sm:$0xf]
    %v1189 = vld [vmem:[#allocation11] sm:$0xff]
    %v1190 = vld [vmem:[#allocation11 + $0x8] sm:$0xff]
    %v1191 = vld [vmem:[#allocation11 + $0x10] sm:$0xff]
    %v1192 = vld [vmem:[#allocation11 + $0x18] sm:$0xff]
    %v1193 = vld [vmem:[#allocation11 + $0x20] sm:$0xff]
    %v1194 = vld [vmem:[#allocation11 + $0x28] sm:$0xff]
    %v1195 = vld [vmem:[#allocation11 + $0x30] sm:$0xff]
    %v1196 = vld [vmem:[#allocation11 + $0x38] sm:$0xff]
    %v1197 = vld [vmem:[#allocation11 + $0x40] sm:$0xff]
    %v1198 = vld [vmem:[#allocation11 + $0x48] sm:$0xff]
    %v1199 = vld [vmem:[#allocation11 + $0x50] sm:$0xff]
    %v1200 = vld [vmem:[#allocation11 + $0x58] sm:$0xff]
    %v1201 = vld [vmem:[#allocation11 + $0x60] sm:$0xff]
    %v1202 = vld [vmem:[#allocation11 + $0x68] sm:$0xff]
    %v1203 = vld [vmem:[#allocation11 + $0x70] sm:$0xff]
    %v1204 = vld [vmem:[#allocation11 + $0x78] sm:$0xff]
    %v1206 = vsel %vm190, %v1185, 0
    %1208 = vmatprep.subr.mxu0 %v1190
    %1209 = vmatpush1.msra.mxu0 %v1189
    %1210 = vmatprep.subr.mxu0 %v1194
    %1211 = vmatpush1.msra.mxu0 %v1193
    %1212 = vmatprep.subr.mxu0 %v1198
    %1213 = vmatpush1.msra.mxu0 %v1197
    %1214 = vmatprep.subr.mxu0 %v1202
    %1215 = vmatpush1.msra.mxu0 %v1201
    %1216 = vmatprep.subr.mxu0 0.0
    %1217 = vmatpush1.msra.mxu0 0.0
    %1218 = vmatprep.subr.mxu0 0.0
    %1219 = vmatpush1.msra.mxu0 0.0
    %1220 = vmatprep.subr.mxu0 0.0
    %1221 = vmatpush1.msra.mxu0 0.0
    %1222 = vmatprep.subr.mxu0 0.0
    %1223 = vmatpush1.msra.mxu0 0.0
    %1224 = vmatprep.subr.mxu0 0.0
    %1225 = vmatpush1.msra.mxu0 0.0
    %1226 = vmatprep.subr.mxu0 0.0
    %1227 = vmatpush1.msra.mxu0 0.0
    %1228 = vmatprep.subr.mxu0 0.0
    %1229 = vmatpush1.msra.mxu0 0.0
    %1230 = vmatprep.subr.mxu0 0.0
    %1231 = vmatpush1.msra.mxu0 0.0
    %1232 = vmatprep.subr.mxu0 0.0
    %1233 = vmatpush1.msra.mxu0 0.0
    %1234 = vmatprep.subr.mxu0 0.0
    %1235 = vmatpush1.msra.mxu0 0.0
    %1236 = vmatprep.subr.mxu0 0.0
    %1237 = vmatpush1.msra.mxu0 0.0
    %1238 = vmatprep.subr.mxu0 0.0
    %1239 = vmatpush1.msra.mxu0 0.0
    %1240 = vmatprep.subr.mxu0 0.0
    %1241 = vmatpush1.msra.mxu0 0.0
    %1242 = vmatprep.subr.mxu0 0.0
    %1243 = vmatpush1.msra.mxu0 0.0
    %1244 = vmatprep.subr.mxu0 0.0
    %1245 = vmatpush1.msra.mxu0 0.0
    %1246 = vmatprep.subr.mxu0 0.0
    %1247 = vmatpush1.msra.mxu0 0.0
    %1248 = vmatprep.subr.mxu0 0.0
    %1249 = vmatpush1.msra.mxu0 0.0
    %1250 = vmatprep.subr.mxu0 0.0
    %1251 = vmatpush1.msra.mxu0 0.0
    %1252 = vmatprep.subr.mxu0 0.0
    %1253 = vmatpush1.msra.mxu0 0.0
    %1254 = vmatprep.subr.mxu0 0.0
    %1255 = vmatpush1.msra.mxu0 0.0
    %1256 = vmatprep.subr.mxu0 0.0
    %1257 = vmatpush1.msra.mxu0 0.0
    %1258 = vmatprep.subr.mxu0 0.0
    %1259 = vmatpush1.msra.mxu0 0.0
    %1260 = vmatprep.subr.mxu0 0.0
    %1261 = vmatpush1.msra.mxu0 0.0
    %1262 = vmatprep.subr.mxu0 0.0
    %1263 = vmatpush1.msra.mxu0 0.0
    %1264 = vmatprep.subr.mxu0 0.0
    %1265 = vmatpush1.msra.mxu0 0.0
    %1266 = vmatprep.subr.mxu0 0.0
    %1267 = vmatpush1.msra.mxu0 0.0
    %1268 = vmatprep.subr.mxu0 0.0
    %1269 = vmatpush1.msra.mxu0 0.0
    %1270 = vmatprep.subr.mxu0 0.0
    %1271 = vmatpush1.msra.mxu0 0.0
    %1272 = vmatprep.mubr.f32.mxu0 0.0
    %1273 = vmatmul.mubr.f32.gmra.mrb[0].mxu0 %v1206
    %v1274 = vpop.f32.mrb[0].mxu0
    %v1275 = vadd.f32 0.0, %v1274
    %v1276 = vpop.f32.mrb[0].mxu0
    %v1277 = vadd.f32 0.0, %v1276
    %1278 = vdwg.mxu0
    %1279 = vmatprep.subr.mxu0 %v1192
    %1280 = vmatpush1.msra.mxu0 %v1191
    %1281 = vmatprep.subr.mxu0 %v1196
    %1282 = vmatpush1.msra.mxu0 %v1195
    %1283 = vmatprep.subr.mxu0 %v1200
    %1284 = vmatpush1.msra.mxu0 %v1199
    %1285 = vmatprep.subr.mxu0 %v1204
    %1286 = vmatpush1.msra.mxu0 %v1203
    %1287 = vmatprep.subr.mxu0 0.0
    %1288 = vmatpush1.msra.mxu0 0.0
    %1289 = vmatprep.subr.mxu0 0.0
    %1290 = vmatpush1.msra.mxu0 0.0
    %1291 = vmatprep.subr.mxu0 0.0
    %1292 = vmatpush1.msra.mxu0 0.0
    %1293 = vmatprep.subr.mxu0 0.0
    %1294 = vmatpush1.msra.mxu0 0.0
    %1295 = vmatprep.subr.mxu0 0.0
    %1296 = vmatpush1.msra.mxu0 0.0
    %1297 = vmatprep.subr.mxu0 0.0
    %1298 = vmatpush1.msra.mxu0 0.0
    %1299 = vmatprep.subr.mxu0 0.0
    %1300 = vmatpush1.msra.mxu0 0.0
    %1301 = vmatprep.subr.mxu0 0.0
    %1302 = vmatpush1.msra.mxu0 0.0
    %1303 = vmatprep.subr.mxu0 0.0
    %1304 = vmatpush1.msra.mxu0 0.0
    %1305 = vmatprep.subr.mxu0 0.0
    %1306 = vmatpush1.msra.mxu0 0.0
    %1307 = vmatprep.subr.mxu0 0.0
    %1308 = vmatpush1.msra.mxu0 0.0
    %1309 = vmatprep.subr.mxu0 0.0
    %1310 = vmatpush1.msra.mxu0 0.0
    %1311 = vmatprep.subr.mxu0 0.0
    %1312 = vmatpush1.msra.mxu0 0.0
    %1313 = vmatprep.subr.mxu0 0.0
    %1314 = vmatpush1.msra.mxu0 0.0
    %1315 = vmatprep.subr.mxu0 0.0
    %1316 = vmatpush1.msra.mxu0 0.0
    %1317 = vmatprep.subr.mxu0 0.0
    %1318 = vmatpush1.msra.mxu0 0.0
    %1319 = vmatprep.subr.mxu0 0.0
    %1320 = vmatpush1.msra.mxu0 0.0
    %1321 = vmatprep.subr.mxu0 0.0
    %1322 = vmatpush1.msra.mxu0 0.0
    %1323 = vmatprep.subr.mxu0 0.0
    %1324 = vmatpush1.msra.mxu0 0.0
    %1325 = vmatprep.subr.mxu0 0.0
    %1326 = vmatpush1.msra.mxu0 0.0
    %1327 = vmatprep.subr.mxu0 0.0
    %1328 = vmatpush1.msra.mxu0 0.0
    %1329 = vmatprep.subr.mxu0 0.0
    %1330 = vmatpush1.msra.mxu0 0.0
    %1331 = vmatprep.subr.mxu0 0.0
    %1332 = vmatpush1.msra.mxu0 0.0
    %1333 = vmatprep.subr.mxu0 0.0
    %1334 = vmatpush1.msra.mxu0 0.0
    %1335 = vmatprep.subr.mxu0 0.0
    %1336 = vmatpush1.msra.mxu0 0.0
    %1337 = vmatprep.subr.mxu0 0.0
    %1338 = vmatpush1.msra.mxu0 0.0
    %1339 = vmatprep.subr.mxu0 0.0
    %1340 = vmatpush1.msra.mxu0 0.0
    %1341 = vmatprep.subr.mxu0 0.0
    %1342 = vmatpush1.msra.mxu0 0.0
    %1343 = vmatprep.mubr.f32.mxu0 0.0
    %1344 = vmatmul.mubr.f32.gmra.mrb[0].mxu0 %v1206
    %v1345 = vpop.f32.mrb[0].mxu0
    %v1346 = vadd.f32 0.0, %v1345
    %v1347 = vpop.f32.mrb[0].mxu0
    %v1348 = vadd.f32 0.0, %v1347
    %1349 = vdwg.mxu0
    %v1354 = vcombine.low %v1275, %v1277
    %v1355 = vcombine.low %v1346, %v1348
    %v1357 = vunpack.c.l.s4 1966171168
    %v1358 = vunpack.c.0.s8 %v1357
    %v1359 = vlaneseq
    %v1360 = vshrl.u32 %v1359, 7
    %v1361 = vsub.s32 %v1358, %v1360
    %v1362 = vrot.slane %v1354, %v1361
    %v1364 = vunpack.c.l.s4 1966171168
    %v1365 = vunpack.c.0.s8 %v1364
    %v1366 = vlaneseq
    %v1367 = vshrl.u32 %v1366, 7
    %v1368 = vsub.s32 %v1365, %v1367
    %v1369 = vrot.slane %v1355, %v1368
    %v1370 = vcombine.low %v1362, %v1369
    %v1372 = vunpack.c.l.s4 1966171168
    %v1373 = vunpack.c.0.s8 %v1372
    %v1374 = vlaneseq
    %v1375 = vshrl.u32 %v1374, 7
    %v1376 = vsub.s32 %v1373, %v1375
    %v1377 = vrot.slane %v1370, %v1376
    %v1379 = vadd.f32 %v1188, %v1377
    %v1380 = vmul.f32 %v1379, 0.5
    %v1381 = vtanh.pop %v1380
    %v1382 = vadd.f32 %v1381, 1.0
    %v1383 = vmul.f32 %v1382, 0.5
    %v1385 = vrot.slane %v1379, 3
    %v1387 = vtanh.pop %v1385
    %v1389 = vrot.slane %v1383, 1
    %v1391 = vmul.f32 %v1389, %v1181
    %v1392 = vmul.f32 %v1383, %v1387
    %v1393 = vadd.f32 %v1391, %v1392
    %v1394 = vtanh.pop %v1393
    %v1395 = vrot.slane %v1383, 2
    %v1397 = vmul.f32 %v1395, %v1394
    %1398 = vst [vmem:[#allocation3 + $0x4] sm:$0x1] %v1397
    %s1399 = scalar_lea.vmem [#allocation2], 5
    %v1400 = vld [vmem:[%s1399] ss:$8 sm:$0xf]
    %v1401 = vld [vmem:[#allocation11] sm:$0xff]
    %v1402 = vld [vmem:[#allocation11 + $0x8] sm:$0xff]
    %v1403 = vld [vmem:[#allocation11 + $0x10] sm:$0xff]
    %v1404 = vld [vmem:[#allocation11 + $0x18] sm:$0xff]
    %v1405 = vld [vmem:[#allocation11 + $0x20] sm:$0xff]
    %v1406 = vld [vmem:[#allocation11 + $0x28] sm:$0xff]
    %v1407 = vld [vmem:[#allocation11 + $0x30] sm:$0xff]
    %v1408 = vld [vmem:[#allocation11 + $0x38] sm:$0xff]
    %v1409 = vld [vmem:[#allocation11 + $0x40] sm:$0xff]
    %v1410 = vld [vmem:[#allocation11 + $0x48] sm:$0xff]
    %v1411 = vld [vmem:[#allocation11 + $0x50] sm:$0xff]
    %v1412 = vld [vmem:[#allocation11 + $0x58] sm:$0xff]
    %v1413 = vld [vmem:[#allocation11 + $0x60] sm:$0xff]
    %v1414 = vld [vmem:[#allocation11 + $0x68] sm:$0xff]
    %v1415 = vld [vmem:[#allocation11 + $0x70] sm:$0xff]
    %v1416 = vld [vmem:[#allocation11 + $0x78] sm:$0xff]
    %v1418 = vsel %vm190, %v1397, 0
    %1420 = vmatprep.subr.mxu0 %v1402
    %1421 = vmatpush1.msra.mxu0 %v1401
    %1422 = vmatprep.subr.mxu0 %v1406
    %1423 = vmatpush1.msra.mxu0 %v1405
    %1424 = vmatprep.subr.mxu0 %v1410
    %1425 = vmatpush1.msra.mxu0 %v1409
    %1426 = vmatprep.subr.mxu0 %v1414
    %1427 = vmatpush1.msra.mxu0 %v1413
    %1428 = vmatprep.subr.mxu0 0.0
    %1429 = vmatpush1.msra.mxu0 0.0
    %1430 = vmatprep.subr.mxu0 0.0
    %1431 = vmatpush1.msra.mxu0 0.0
    %1432 = vmatprep.subr.mxu0 0.0
    %1433 = vmatpush1.msra.mxu0 0.0
    %1434 = vmatprep.subr.mxu0 0.0
    %1435 = vmatpush1.msra.mxu0 0.0
    %1436 = vmatprep.subr.mxu0 0.0
    %1437 = vmatpush1.msra.mxu0 0.0
    %1438 = vmatprep.subr.mxu0 0.0
    %1439 = vmatpush1.msra.mxu0 0.0
    %1440 = vmatprep.subr.mxu0 0.0
    %1441 = vmatpush1.msra.mxu0 0.0
    %1442 = vmatprep.subr.mxu0 0.0
    %1443 = vmatpush1.msra.mxu0 0.0
    %1444 = vmatprep.subr.mxu0 0.0
    %1445 = vmatpush1.msra.mxu0 0.0
    %1446 = vmatprep.subr.mxu0 0.0
    %1447 = vmatpush1.msra.mxu0 0.0
    %1448 = vmatprep.subr.mxu0 0.0
    %1449 = vmatpush1.msra.mxu0 0.0
    %1450 = vmatprep.subr.mxu0 0.0
    %1451 = vmatpush1.msra.mxu0 0.0
    %1452 = vmatprep.subr.mxu0 0.0
    %1453 = vmatpush1.msra.mxu0 0.0
    %1454 = vmatprep.subr.mxu0 0.0
    %1455 = vmatpush1.msra.mxu0 0.0
    %1456 = vmatprep.subr.mxu0 0.0
    %1457 = vmatpush1.msra.mxu0 0.0
    %1458 = vmatprep.subr.mxu0 0.0
    %1459 = vmatpush1.msra.mxu0 0.0
    %1460 = vmatprep.subr.mxu0 0.0
    %1461 = vmatpush1.msra.mxu0 0.0
    %1462 = vmatprep.subr.mxu0 0.0
    %1463 = vmatpush1.msra.mxu0 0.0
    %1464 = vmatprep.subr.mxu0 0.0
    %1465 = vmatpush1.msra.mxu0 0.0
    %1466 = vmatprep.subr.mxu0 0.0
    %1467 = vmatpush1.msra.mxu0 0.0
    %1468 = vmatprep.subr.mxu0 0.0
    %1469 = vmatpush1.msra.mxu0 0.0
    %1470 = vmatprep.subr.mxu0 0.0
    %1471 = vmatpush1.msra.mxu0 0.0
    %1472 = vmatprep.subr.mxu0 0.0
    %1473 = vmatpush1.msra.mxu0 0.0
    %1474 = vmatprep.subr.mxu0 0.0
    %1475 = vmatpush1.msra.mxu0 0.0
    %1476 = vmatprep.subr.mxu0 0.0
    %1477 = vmatpush1.msra.mxu0 0.0
    %1478 = vmatprep.subr.mxu0 0.0
    %1479 = vmatpush1.msra.mxu0 0.0
    %1480 = vmatprep.subr.mxu0 0.0
    %1481 = vmatpush1.msra.mxu0 0.0
    %1482 = vmatprep.subr.mxu0 0.0
    %1483 = vmatpush1.msra.mxu0 0.0
    %1484 = vmatprep.mubr.f32.mxu0 0.0
    %1485 = vmatmul.mubr.f32.gmra.mrb[0].mxu0 %v1418
    %v1486 = vpop.f32.mrb[0].mxu0
    %v1487 = vadd.f32 0.0, %v1486
    %v1488 = vpop.f32.mrb[0].mxu0
    %v1489 = vadd.f32 0.0, %v1488
    %1490 = vdwg.mxu0
    %1491 = vmatprep.subr.mxu0 %v1404
    %1492 = vmatpush1.msra.mxu0 %v1403
    %1493 = vmatprep.subr.mxu0 %v1408
    %1494 = vmatpush1.msra.mxu0 %v1407
    %1495 = vmatprep.subr.mxu0 %v1412
    %1496 = vmatpush1.msra.mxu0 %v1411
    %1497 = vmatprep.subr.mxu0 %v1416
    %1498 = vmatpush1.msra.mxu0 %v1415
    %1499 = vmatprep.subr.mxu0 0.0
    %1500 = vmatpush1.msra.mxu0 0.0
    %1501 = vmatprep.subr.mxu0 0.0
    %1502 = vmatpush1.msra.mxu0 0.0
    %1503 = vmatprep.subr.mxu0 0.0
    %1504 = vmatpush1.msra.mxu0 0.0
    %1505 = vmatprep.subr.mxu0 0.0
    %1506 = vmatpush1.msra.mxu0 0.0
    %1507 = vmatprep.subr.mxu0 0.0
    %1508 = vmatpush1.msra.mxu0 0.0
    %1509 = vmatprep.subr.mxu0 0.0
    %1510 = vmatpush1.msra.mxu0 0.0
    %1511 = vmatprep.subr.mxu0 0.0
    %1512 = vmatpush1.msra.mxu0 0.0
    %1513 = vmatprep.subr.mxu0 0.0
    %1514 = vmatpush1.msra.mxu0 0.0
    %1515 = vmatprep.subr.mxu0 0.0
    %1516 = vmatpush1.msra.mxu0 0.0
    %1517 = vmatprep.subr.mxu0 0.0
    %1518 = vmatpush1.msra.mxu0 0.0
    %1519 = vmatprep.subr.mxu0 0.0
    %1520 = vmatpush1.msra.mxu0 0.0
    %1521 = vmatprep.subr.mxu0 0.0
    %1522 = vmatpush1.msra.mxu0 0.0
    %1523 = vmatprep.subr.mxu0 0.0
    %1524 = vmatpush1.msra.mxu0 0.0
    %1525 = vmatprep.subr.mxu0 0.0
    %1526 = vmatpush1.msra.mxu0 0.0
    %1527 = vmatprep.subr.mxu0 0.0
    %1528 = vmatpush1.msra.mxu0 0.0
    %1529 = vmatprep.subr.mxu0 0.0
    %1530 = vmatpush1.msra.mxu0 0.0
    %1531 = vmatprep.subr.mxu0 0.0
    %1532 = vmatpush1.msra.mxu0 0.0
    %1533 = vmatprep.subr.mxu0 0.0
    %1534 = vmatpush1.msra.mxu0 0.0
    %1535 = vmatprep.subr.mxu0 0.0
    %1536 = vmatpush1.msra.mxu0 0.0
    %1537 = vmatprep.subr.mxu0 0.0
    %1538 = vmatpush1.msra.mxu0 0.0
    %1539 = vmatprep.subr.mxu0 0.0
    %1540 = vmatpush1.msra.mxu0 0.0
    %1541 = vmatprep.subr.mxu0 0.0
    %1542 = vmatpush1.msra.mxu0 0.0
    %1543 = vmatprep.subr.mxu0 0.0
    %1544 = vmatpush1.msra.mxu0 0.0
    %1545 = vmatprep.subr.mxu0 0.0
    %1546 = vmatpush1.msra.mxu0 0.0
    %1547 = vmatprep.subr.mxu0 0.0
    %1548 = vmatpush1.msra.mxu0 0.0
    %1549 = vmatprep.subr.mxu0 0.0
    %1550 = vmatpush1.msra.mxu0 0.0
    %1551 = vmatprep.subr.mxu0 0.0
    %1552 = vmatpush1.msra.mxu0 0.0
    %1553 = vmatprep.subr.mxu0 0.0
    %1554 = vmatpush1.msra.mxu0 0.0
    %1555 = vmatprep.mubr.f32.mxu0 0.0
    %1556 = vmatmul.mubr.f32.gmra.mrb[0].mxu0 %v1418
    %v1557 = vpop.f32.mrb[0].mxu0
    %v1558 = vadd.f32 0.0, %v1557
    %v1559 = vpop.f32.mrb[0].mxu0
    %v1560 = vadd.f32 0.0, %v1559
    %1561 = vdwg.mxu0
    %v1566 = vcombine.low %v1487, %v1489
    %v1567 = vcombine.low %v1558, %v1560
    %v1569 = vunpack.c.l.s4 1966171168
    %v1570 = vunpack.c.0.s8 %v1569
    %v1571 = vlaneseq
    %v1572 = vshrl.u32 %v1571, 7
    %v1573 = vsub.s32 %v1570, %v1572
    %v1574 = vrot.slane %v1566, %v1573
    %v1576 = vunpack.c.l.s4 1966171168
    %v1577 = vunpack.c.0.s8 %v1576
    %v1578 = vlaneseq
    %v1579 = vshrl.u32 %v1578, 7
    %v1580 = vsub.s32 %v1577, %v1579
    %v1581 = vrot.slane %v1567, %v1580
    %v1582 = vcombine.low %v1574, %v1581
    %v1584 = vunpack.c.l.s4 1966171168
    %v1585 = vunpack.c.0.s8 %v1584
    %v1586 = vlaneseq
    %v1587 = vshrl.u32 %v1586, 7
    %v1588 = vsub.s32 %v1585, %v1587
    %v1589 = vrot.slane %v1582, %v1588
    %v1591 = vadd.f32 %v1400, %v1589
    %v1592 = vmul.f32 %v1591, 0.5
    %v1593 = vtanh.pop %v1592
    %v1594 = vadd.f32 %v1593, 1.0
    %v1595 = vmul.f32 %v1594, 0.5
    %v1597 = vrot.slane %v1591, 3
    %v1599 = vtanh.pop %v1597
    %v1601 = vrot.slane %v1595, 1
    %v1603 = vmul.f32 %v1601, %v1393
    %v1604 = vmul.f32 %v1595, %v1599
    %v1605 = vadd.f32 %v1603, %v1604
    %v1606 = vtanh.pop %v1605
    %v1607 = vrot.slane %v1595, 2
    %v1609 = vmul.f32 %v1607, %v1606
    %1610 = vst [vmem:[#allocation3 + $0x5] sm:$0x1] %v1609
    %s1611 = scalar_lea.vmem [#allocation2], 6
    %v1612 = vld [vmem:[%s1611] ss:$8 sm:$0xf]
    %v1613 = vld [vmem:[#allocation11] sm:$0xff]
    %v1614 = vld [vmem:[#allocation11 + $0x8] sm:$0xff]
    %v1615 = vld [vmem:[#allocation11 + $0x10] sm:$0xff]
    %v1616 = vld [vmem:[#allocation11 + $0x18] sm:$0xff]
    %v1617 = vld [vmem:[#allocation11 + $0x20] sm:$0xff]
    %v1618 = vld [vmem:[#allocation11 + $0x28] sm:$0xff]
    %v1619 = vld [vmem:[#allocation11 + $0x30] sm:$0xff]
    %v1620 = vld [vmem:[#allocation11 + $0x38] sm:$0xff]
    %v1621 = vld [vmem:[#allocation11 + $0x40] sm:$0xff]
    %v1622 = vld [vmem:[#allocation11 + $0x48] sm:$0xff]
    %v1623 = vld [vmem:[#allocation11 + $0x50] sm:$0xff]
    %v1624 = vld [vmem:[#allocation11 + $0x58] sm:$0xff]
    %v1625 = vld [vmem:[#allocation11 + $0x60] sm:$0xff]
    %v1626 = vld [vmem:[#allocation11 + $0x68] sm:$0xff]
    %v1627 = vld [vmem:[#allocation11 + $0x70] sm:$0xff]
    %v1628 = vld [vmem:[#allocation11 + $0x78] sm:$0xff]
    %v1630 = vsel %vm190, %v1609, 0
    %1632 = vmatprep.subr.mxu0 %v1614
    %1633 = vmatpush1.msra.mxu0 %v1613
    %1634 = vmatprep.subr.mxu0 %v1618
    %1635 = vmatpush1.msra.mxu0 %v1617
    %1636 = vmatprep.subr.mxu0 %v1622
    %1637 = vmatpush1.msra.mxu0 %v1621
    %1638 = vmatprep.subr.mxu0 %v1626
    %1639 = vmatpush1.msra.mxu0 %v1625
    %1640 = vmatprep.subr.mxu0 0.0
    %1641 = vmatpush1.msra.mxu0 0.0
    %1642 = vmatprep.subr.mxu0 0.0
    %1643 = vmatpush1.msra.mxu0 0.0
    %1644 = vmatprep.subr.mxu0 0.0
    %1645 = vmatpush1.msra.mxu0 0.0
    %1646 = vmatprep.subr.mxu0 0.0
    %1647 = vmatpush1.msra.mxu0 0.0
    %1648 = vmatprep.subr.mxu0 0.0
    %1649 = vmatpush1.msra.mxu0 0.0
    %1650 = vmatprep.subr.mxu0 0.0
    %1651 = vmatpush1.msra.mxu0 0.0
    %1652 = vmatprep.subr.mxu0 0.0
    %1653 = vmatpush1.msra.mxu0 0.0
    %1654 = vmatprep.subr.mxu0 0.0
    %1655 = vmatpush1.msra.mxu0 0.0
    %1656 = vmatprep.subr.mxu0 0.0
    %1657 = vmatpush1.msra.mxu0 0.0
    %1658 = vmatprep.subr.mxu0 0.0
    %1659 = vmatpush1.msra.mxu0 0.0
    %1660 = vmatprep.subr.mxu0 0.0
    %1661 = vmatpush1.msra.mxu0 0.0
    %1662 = vmatprep.subr.mxu0 0.0
    %1663 = vmatpush1.msra.mxu0 0.0
    %1664 = vmatprep.subr.mxu0 0.0
    %1665 = vmatpush1.msra.mxu0 0.0
    %1666 = vmatprep.subr.mxu0 0.0
    %1667 = vmatpush1.msra.mxu0 0.0
    %1668 = vmatprep.subr.mxu0 0.0
    %1669 = vmatpush1.msra.mxu0 0.0
    %1670 = vmatprep.subr.mxu0 0.0
    %1671 = vmatpush1.msra.mxu0 0.0
    %1672 = vmatprep.subr.mxu0 0.0
    %1673 = vmatpush1.msra.mxu0 0.0
    %1674 = vmatprep.subr.mxu0 0.0
    %1675 = vmatpush1.msra.mxu0 0.0
    %1676 = vmatprep.subr.mxu0 0.0
    %1677 = vmatpush1.msra.mxu0 0.0
    %1678 = vmatprep.subr.mxu0 0.0
    %1679 = vmatpush1.msra.mxu0 0.0
    %1680 = vmatprep.subr.mxu0 0.0
    %1681 = vmatpush1.msra.mxu0 0.0
    %1682 = vmatprep.subr.mxu0 0.0
    %1683 = vmatpush1.msra.mxu0 0.0
    %1684 = vmatprep.subr.mxu0 0.0
    %1685 = vmatpush1.msra.mxu0 0.0
    %1686 = vmatprep.subr.mxu0 0.0
    %1687 = vmatpush1.msra.mxu0 0.0
    %1688 = vmatprep.subr.mxu0 0.0
    %1689 = vmatpush1.msra.mxu0 0.0
    %1690 = vmatprep.subr.mxu0 0.0
    %1691 = vmatpush1.msra.mxu0 0.0
    %1692 = vmatprep.subr.mxu0 0.0
    %1693 = vmatpush1.msra.mxu0 0.0
    %1694 = vmatprep.subr.mxu0 0.0
    %1695 = vmatpush1.msra.mxu0 0.0
    %1696 = vmatprep.mubr.f32.mxu0 0.0
    %1697 = vmatmul.mubr.f32.gmra.mrb[0].mxu0 %v1630
    %v1698 = vpop.f32.mrb[0].mxu0
    %v1699 = vadd.f32 0.0, %v1698
    %v1700 = vpop.f32.mrb[0].mxu0
    %v1701 = vadd.f32 0.0, %v1700
    %1702 = vdwg.mxu0
    %1703 = vmatprep.subr.mxu0 %v1616
    %1704 = vmatpush1.msra.mxu0 %v1615
    %1705 = vmatprep.subr.mxu0 %v1620
    %1706 = vmatpush1.msra.mxu0 %v1619
    %1707 = vmatprep.subr.mxu0 %v1624
    %1708 = vmatpush1.msra.mxu0 %v1623
    %1709 = vmatprep.subr.mxu0 %v1628
    %1710 = vmatpush1.msra.mxu0 %v1627
    %1711 = vmatprep.subr.mxu0 0.0
    %1712 = vmatpush1.msra.mxu0 0.0
    %1713 = vmatprep.subr.mxu0 0.0
    %1714 = vmatpush1.msra.mxu0 0.0
    %1715 = vmatprep.subr.mxu0 0.0
    %1716 = vmatpush1.msra.mxu0 0.0
    %1717 = vmatprep.subr.mxu0 0.0
    %1718 = vmatpush1.msra.mxu0 0.0
    %1719 = vmatprep.subr.mxu0 0.0
    %1720 = vmatpush1.msra.mxu0 0.0
    %1721 = vmatprep.subr.mxu0 0.0
    %1722 = vmatpush1.msra.mxu0 0.0
    %1723 = vmatprep.subr.mxu0 0.0
    %1724 = vmatpush1.msra.mxu0 0.0
    %1725 = vmatprep.subr.mxu0 0.0
    %1726 = vmatpush1.msra.mxu0 0.0
    %1727 = vmatprep.subr.mxu0 0.0
    %1728 = vmatpush1.msra.mxu0 0.0
    %1729 = vmatprep.subr.mxu0 0.0
    %1730 = vmatpush1.msra.mxu0 0.0
    %1731 = vmatprep.subr.mxu0 0.0
    %1732 = vmatpush1.msra.mxu0 0.0
    %1733 = vmatprep.subr.mxu0 0.0
    %1734 = vmatpush1.msra.mxu0 0.0
    %1735 = vmatprep.subr.mxu0 0.0
    %1736 = vmatpush1.msra.mxu0 0.0
    %1737 = vmatprep.subr.mxu0 0.0
    %1738 = vmatpush1.msra.mxu0 0.0
    %1739 = vmatprep.subr.mxu0 0.0
    %1740 = vmatpush1.msra.mxu0 0.0
    %1741 = vmatprep.subr.mxu0 0.0
    %1742 = vmatpush1.msra.mxu0 0.0
    %1743 = vmatprep.subr.mxu0 0.0
    %1744 = vmatpush1.msra.mxu0 0.0
    %1745 = vmatprep.subr.mxu0 0.0
    %1746 = vmatpush1.msra.mxu0 0.0
    %1747 = vmatprep.subr.mxu0 0.0
    %1748 = vmatpush1.msra.mxu0 0.0
    %1749 = vmatprep.subr.mxu0 0.0
    %1750 = vmatpush1.msra.mxu0 0.0
    %1751 = vmatprep.subr.mxu0 0.0
    %1752 = vmatpush1.msra.mxu0 0.0
    %1753 = vmatprep.subr.mxu0 0.0
    %1754 = vmatpush1.msra.mxu0 0.0
    %1755 = vmatprep.subr.mxu0 0.0
    %1756 = vmatpush1.msra.mxu0 0.0
    %1757 = vmatprep.subr.mxu0 0.0
    %1758 = vmatpush1.msra.mxu0 0.0
    %1759 = vmatprep.subr.mxu0 0.0
    %1760 = vmatpush1.msra.mxu0 0.0
    %1761 = vmatprep.subr.mxu0 0.0
    %1762 = vmatpush1.msra.mxu0 0.0
    %1763 = vmatprep.subr.mxu0 0.0
    %1764 = vmatpush1.msra.mxu0 0.0
    %1765 = vmatprep.subr.mxu0 0.0
    %1766 = vmatpush1.msra.mxu0 0.0
    %1767 = vmatprep.mubr.f32.mxu0 0.0
    %1768 = vmatmul.mubr.f32.gmra.mrb[0].mxu0 %v1630
    %v1769 = vpop.f32.mrb[0].mxu0
    %v1770 = vadd.f32 0.0, %v1769
    %v1771 = vpop.f32.mrb[0].mxu0
    %v1772 = vadd.f32 0.0, %v1771
    %1773 = vdwg.mxu0
    %v1778 = vcombine.low %v1699, %v1701
    %v1779 = vcombine.low %v1770, %v1772
    %v1781 = vunpack.c.l.s4 1966171168
    %v1782 = vunpack.c.0.s8 %v1781
    %v1783 = vlaneseq
    %v1784 = vshrl.u32 %v1783, 7
    %v1785 = vsub.s32 %v1782, %v1784
    %v1786 = vrot.slane %v1778, %v1785
    %v1788 = vunpack.c.l.s4 1966171168
    %v1789 = vunpack.c.0.s8 %v1788
    %v1790 = vlaneseq
    %v1791 = vshrl.u32 %v1790, 7
    %v1792 = vsub.s32 %v1789, %v1791
    %v1793 = vrot.slane %v1779, %v1792
    %v1794 = vcombine.low %v1786, %v1793
    %v1796 = vunpack.c.l.s4 1966171168
    %v1797 = vunpack.c.0.s8 %v1796
    %v1798 = vlaneseq
    %v1799 = vshrl.u32 %v1798, 7
    %v1800 = vsub.s32 %v1797, %v1799
    %v1801 = vrot.slane %v1794, %v1800
    %v1803 = vadd.f32 %v1612, %v1801
    %v1804 = vmul.f32 %v1803, 0.5
    %v1805 = vtanh.pop %v1804
    %v1806 = vadd.f32 %v1805, 1.0
    %v1807 = vmul.f32 %v1806, 0.5
    %v1809 = vrot.slane %v1803, 3
    %v1811 = vtanh.pop %v1809
    %v1813 = vrot.slane %v1807, 1
    %v1815 = vmul.f32 %v1813, %v1605
    %v1816 = vmul.f32 %v1807, %v1811
    %v1817 = vadd.f32 %v1815, %v1816
    %v1818 = vtanh.pop %v1817
    %v1819 = vrot.slane %v1807, 2
    %v1821 = vmul.f32 %v1819, %v1818
    %1822 = vst [vmem:[#allocation3 + $0x6] sm:$0x1] %v1821
    %s1823 = scalar_lea.vmem [#allocation2], 7
    %v1824 = vld [vmem:[%s1823] ss:$8 sm:$0xf]
    %v1825 = vld [vmem:[#allocation11] sm:$0xff]
    %v1826 = vld [vmem:[#allocation11 + $0x8] sm:$0xff]
    %v1827 = vld [vmem:[#allocation11 + $0x10] sm:$0xff]
    %v1828 = vld [vmem:[#allocation11 + $0x18] sm:$0xff]
    %v1829 = vld [vmem:[#allocation11 + $0x20] sm:$0xff]
    %v1830 = vld [vmem:[#allocation11 + $0x28] sm:$0xff]
    %v1831 = vld [vmem:[#allocation11 + $0x30] sm:$0xff]
    %v1832 = vld [vmem:[#allocation11 + $0x38] sm:$0xff]
    %v1833 = vld [vmem:[#allocation11 + $0x40] sm:$0xff]
    %v1834 = vld [vmem:[#allocation11 + $0x48] sm:$0xff]
    %v1835 = vld [vmem:[#allocation11 + $0x50] sm:$0xff]
    %v1836 = vld [vmem:[#allocation11 + $0x58] sm:$0xff]
    %v1837 = vld [vmem:[#allocation11 + $0x60] sm:$0xff]
    %v1838 = vld [vmem:[#allocation11 + $0x68] sm:$0xff]
    %v1839 = vld [vmem:[#allocation11 + $0x70] sm:$0xff]
    %v1840 = vld [vmem:[#allocation11 + $0x78] sm:$0xff]
    %v1842 = vsel %vm190, %v1821, 0
    %1844 = vmatprep.subr.mxu0 %v1826
    %1845 = vmatpush1.msra.mxu0 %v1825
    %1846 = vmatprep.subr.mxu0 %v1830
    %1847 = vmatpush1.msra.mxu0 %v1829
    %1848 = vmatprep.subr.mxu0 %v1834
    %1849 = vmatpush1.msra.mxu0 %v1833
    %1850 = vmatprep.subr.mxu0 %v1838
    %1851 = vmatpush1.msra.mxu0 %v1837
    %1852 = vmatprep.subr.mxu0 0.0
    %1853 = vmatpush1.msra.mxu0 0.0
    %1854 = vmatprep.subr.mxu0 0.0
    %1855 = vmatpush1.msra.mxu0 0.0
    %1856 = vmatprep.subr.mxu0 0.0
    %1857 = vmatpush1.msra.mxu0 0.0
    %1858 = vmatprep.subr.mxu0 0.0
    %1859 = vmatpush1.msra.mxu0 0.0
    %1860 = vmatprep.subr.mxu0 0.0
    %1861 = vmatpush1.msra.mxu0 0.0
    %1862 = vmatprep.subr.mxu0 0.0
    %1863 = vmatpush1.msra.mxu0 0.0
    %1864 = vmatprep.subr.mxu0 0.0
    %1865 = vmatpush1.msra.mxu0 0.0
    %1866 = vmatprep.subr.mxu0 0.0
    %1867 = vmatpush1.msra.mxu0 0.0
    %1868 = vmatprep.subr.mxu0 0.0
    %1869 = vmatpush1.msra.mxu0 0.0
    %1870 = vmatprep.subr.mxu0 0.0
    %1871 = vmatpush1.msra.mxu0 0.0
    %1872 = vmatprep.subr.mxu0 0.0
    %1873 = vmatpush1.msra.mxu0 0.0
    %1874 = vmatprep.subr.mxu0 0.0
    %1875 = vmatpush1.msra.mxu0 0.0
    %1876 = vmatprep.subr.mxu0 0.0
    %1877 = vmatpush1.msra.mxu0 0.0
    %1878 = vmatprep.subr.mxu0 0.0
    %1879 = vmatpush1.msra.mxu0 0.0
    %1880 = vmatprep.subr.mxu0 0.0
    %1881 = vmatpush1.msra.mxu0 0.0
    %1882 = vmatprep.subr.mxu0 0.0
    %1883 = vmatpush1.msra.mxu0 0.0
    %1884 = vmatprep.subr.mxu0 0.0
    %1885 = vmatpush1.msra.mxu0 0.0
    %1886 = vmatprep.subr.mxu0 0.0
    %1887 = vmatpush1.msra.mxu0 0.0
    %1888 = vmatprep.subr.mxu0 0.0
    %1889 = vmatpush1.msra.mxu0 0.0
    %1890 = vmatprep.subr.mxu0 0.0
    %1891 = vmatpush1.msra.mxu0 0.0
    %1892 = vmatprep.subr.mxu0 0.0
    %1893 = vmatpush1.msra.mxu0 0.0
    %1894 = vmatprep.subr.mxu0 0.0
    %1895 = vmatpush1.msra.mxu0 0.0
    %1896 = vmatprep.subr.mxu0 0.0
    %1897 = vmatpush1.msra.mxu0 0.0
    %1898 = vmatprep.subr.mxu0 0.0
    %1899 = vmatpush1.msra.mxu0 0.0
    %1900 = vmatprep.subr.mxu0 0.0
    %1901 = vmatpush1.msra.mxu0 0.0
    %1902 = vmatprep.subr.mxu0 0.0
    %1903 = vmatpush1.msra.mxu0 0.0
    %1904 = vmatprep.subr.mxu0 0.0
    %1905 = vmatpush1.msra.mxu0 0.0
    %1906 = vmatprep.subr.mxu0 0.0
    %1907 = vmatpush1.msra.mxu0 0.0
    %1908 = vmatprep.mubr.f32.mxu0 0.0
    %1909 = vmatmul.mubr.f32.gmra.mrb[0].mxu0 %v1842
    %v1910 = vpop.f32.mrb[0].mxu0
    %v1911 = vadd.f32 0.0, %v1910
    %v1912 = vpop.f32.mrb[0].mxu0
    %v1913 = vadd.f32 0.0, %v1912
    %1914 = vdwg.mxu0
    %1915 = vmatprep.subr.mxu0 %v1828
    %1916 = vmatpush1.msra.mxu0 %v1827
    %1917 = vmatprep.subr.mxu0 %v1832
    %1918 = vmatpush1.msra.mxu0 %v1831
    %1919 = vmatprep.subr.mxu0 %v1836
    %1920 = vmatpush1.msra.mxu0 %v1835
    %1921 = vmatprep.subr.mxu0 %v1840
    %1922 = vmatpush1.msra.mxu0 %v1839
    %1923 = vmatprep.subr.mxu0 0.0
    %1924 = vmatpush1.msra.mxu0 0.0
    %1925 = vmatprep.subr.mxu0 0.0
    %1926 = vmatpush1.msra.mxu0 0.0
    %1927 = vmatprep.subr.mxu0 0.0
    %1928 = vmatpush1.msra.mxu0 0.0
    %1929 = vmatprep.subr.mxu0 0.0
    %1930 = vmatpush1.msra.mxu0 0.0
    %1931 = vmatprep.subr.mxu0 0.0
    %1932 = vmatpush1.msra.mxu0 0.0
    %1933 = vmatprep.subr.mxu0 0.0
    %1934 = vmatpush1.msra.mxu0 0.0
    %1935 = vmatprep.subr.mxu0 0.0
    %1936 = vmatpush1.msra.mxu0 0.0
    %1937 = vmatprep.subr.mxu0 0.0
    %1938 = vmatpush1.msra.mxu0 0.0
    %1939 = vmatprep.subr.mxu0 0.0
    %1940 = vmatpush1.msra.mxu0 0.0
    %1941 = vmatprep.subr.mxu0 0.0
    %1942 = vmatpush1.msra.mxu0 0.0
    %1943 = vmatprep.subr.mxu0 0.0
    %1944 = vmatpush1.msra.mxu0 0.0
    %1945 = vmatprep.subr.mxu0 0.0
    %1946 = vmatpush1.msra.mxu0 0.0
    %1947 = vmatprep.subr.mxu0 0.0
    %1948 = vmatpush1.msra.mxu0 0.0
    %1949 = vmatprep.subr.mxu0 0.0
    %1950 = vmatpush1.msra.mxu0 0.0
    %1951 = vmatprep.subr.mxu0 0.0
    %1952 = vmatpush1.msra.mxu0 0.0
    %1953 = vmatprep.subr.mxu0 0.0
    %1954 = vmatpush1.msra.mxu0 0.0
    %1955 = vmatprep.subr.mxu0 0.0
    %1956 = vmatpush1.msra.mxu0 0.0
    %1957 = vmatprep.subr.mxu0 0.0
    %1958 = vmatpush1.msra.mxu0 0.0
    %1959 = vmatprep.subr.mxu0 0.0
    %1960 = vmatpush1.msra.mxu0 0.0
    %1961 = vmatprep.subr.mxu0 0.0
    %1962 = vmatpush1.msra.mxu0 0.0
    %1963 = vmatprep.subr.mxu0 0.0
    %1964 = vmatpush1.msra.mxu0 0.0
    %1965 = vmatprep.subr.mxu0 0.0
    %1966 = vmatpush1.msra.mxu0 0.0
    %1967 = vmatprep.subr.mxu0 0.0
    %1968 = vmatpush1.msra.mxu0 0.0
    %1969 = vmatprep.subr.mxu0 0.0
    %1970 = vmatpush1.msra.mxu0 0.0
    %1971 = vmatprep.subr.mxu0 0.0
    %1972 = vmatpush1.msra.mxu0 0.0
    %1973 = vmatprep.subr.mxu0 0.0
    %1974 = vmatpush1.msra.mxu0 0.0
    %1975 = vmatprep.subr.mxu0 0.0
    %1976 = vmatpush1.msra.mxu0 0.0
    %1977 = vmatprep.subr.mxu0 0.0
    %1978 = vmatpush1.msra.mxu0 0.0
    %1979 = vmatprep.mubr.f32.mxu0 0.0
    %1980 = vmatmul.mubr.f32.gmra.mrb[0].mxu0 %v1842
    %v1981 = vpop.f32.mrb[0].mxu0
    %v1982 = vadd.f32 0.0, %v1981
    %v1983 = vpop.f32.mrb[0].mxu0
    %v1984 = vadd.f32 0.0, %v1983
    %1985 = vdwg.mxu0
    %v1990 = vcombine.low %v1911, %v1913
    %v1991 = vcombine.low %v1982, %v1984
    %v1993 = vunpack.c.l.s4 1966171168
    %v1994 = vunpack.c.0.s8 %v1993
    %v1995 = vlaneseq
    %v1996 = vshrl.u32 %v1995, 7
    %v1997 = vsub.s32 %v1994, %v1996
    %v1998 = vrot.slane %v1990, %v1997
    %v2000 = vunpack.c.l.s4 1966171168
    %v2001 = vunpack.c.0.s8 %v2000
    %v2002 = vlaneseq
    %v2003 = vshrl.u32 %v2002, 7
    %v2004 = vsub.s32 %v2001, %v2003
    %v2005 = vrot.slane %v1991, %v2004
    %v2006 = vcombine.low %v1998, %v2005
    %v2008 = vunpack.c.l.s4 1966171168
    %v2009 = vunpack.c.0.s8 %v2008
    %v2010 = vlaneseq
    %v2011 = vshrl.u32 %v2010, 7
    %v2012 = vsub.s32 %v2009, %v2011
    %v2013 = vrot.slane %v2006, %v2012
    %v2015 = vadd.f32 %v1824, %v2013
    %v2016 = vmul.f32 %v2015, 0.5
    %v2017 = vtanh.pop %v2016
    %v2018 = vadd.f32 %v2017, 1.0
    %v2019 = vmul.f32 %v2018, 0.5
    %v2021 = vrot.slane %v2015, 3
    %v2023 = vtanh.pop %v2021
    %v2025 = vrot.slane %v2019, 1
    %v2027 = vmul.f32 %v2025, %v1817
    %v2028 = vmul.f32 %v2019, %v2023
    %v2029 = vadd.f32 %v2027, %v2028
    %v2030 = vtanh.pop %v2029
    %v2031 = vrot.slane %v2019, 2
    %v2033 = vmul.f32 %v2031, %v2030
    %2034 = vst [vmem:[#allocation3 + $0x7] sm:$0x1] %v2033
    %v2035 = vld [vmem:[#allocation3] sm:$0xff]
    %v2036 = vld [vmem:[#allocation12] sm:$0xff]
    %v2037 = vld [vmem:[#allocation12 + $0x8] sm:$0xff]
    %v2038 = vld [vmem:[#allocation12 + $0x10] sm:$0xff]
    %v2039 = vld [vmem:[#allocation12 + $0x18] sm:$0xff]
    %v2040 = vld [vmem:[#allocation12 + $0x20] sm:$0xff]
    %v2041 = vld [vmem:[#allocation12 + $0x28] sm:$0xff]
    %v2042 = vld [vmem:[#allocation12 + $0x30] sm:$0xff]
    %v2043 = vld [vmem:[#allocation12 + $0x38] sm:$0xff]
    %v2044 = vld [vmem:[#allocation12 + $0x40] sm:$0xff]
    %v2045 = vld [vmem:[#allocation12 + $0x48] sm:$0xff]
    %v2046 = vld [vmem:[#allocation12 + $0x50] sm:$0xff]
    %v2047 = vld [vmem:[#allocation12 + $0x58] sm:$0xff]
    %v2048 = vld [vmem:[#allocation12 + $0x60] sm:$0xff]
    %v2049 = vld [vmem:[#allocation12 + $0x68] sm:$0xff]
    %v2050 = vld [vmem:[#allocation12 + $0x70] sm:$0xff]
    %v2051 = vld [vmem:[#allocation12 + $0x78] sm:$0xff]
    %v2052 = vld [vmem:[%s6] sm:$0x1]
    %v2054 = vlaneseq
    %v2055 = vshrl.u32 %v2054, 7
    %v2056 = vsub.s32 0, %v2055
    %v2057 = vrot.slane %v2052, %v2056
    %2059 = vmatprep.subr.mxu0 0.0
    %2060 = vmatpush1.msra.mxu0 %v2036
    %2061 = vmatprep.subr.mxu0 0.0
    %2062 = vmatpush1.msra.mxu0 %v2037
    %2063 = vmatprep.subr.mxu0 0.0
    %2064 = vmatpush1.msra.mxu0 %v2038
    %2065 = vmatprep.subr.mxu0 0.0
    %2066 = vmatpush1.msra.mxu0 %v2039
    %2067 = vmatprep.subr.mxu0 0.0
    %2068 = vmatpush1.msra.mxu0 %v2040
    %2069 = vmatprep.subr.mxu0 0.0
    %2070 = vmatpush1.msra.mxu0 %v2041
    %2071 = vmatprep.subr.mxu0 0.0
    %2072 = vmatpush1.msra.mxu0 %v2042
    %2073 = vmatprep.subr.mxu0 0.0
    %2074 = vmatpush1.msra.mxu0 %v2043
    %2075 = vmatprep.subr.mxu0 0.0
    %2076 = vmatpush1.msra.mxu0 %v2044
    %2077 = vmatprep.subr.mxu0 0.0
    %2078 = vmatpush1.msra.mxu0 %v2045
    %2079 = vmatprep.subr.mxu0 0.0
    %2080 = vmatpush1.msra.mxu0 %v2046
    %2081 = vmatprep.subr.mxu0 0.0
    %2082 = vmatpush1.msra.mxu0 %v2047
    %2083 = vmatprep.subr.mxu0 0.0
    %2084 = vmatpush1.msra.mxu0 %v2048
    %2085 = vmatprep.subr.mxu0 0.0
    %2086 = vmatpush1.msra.mxu0 %v2049
    %2087 = vmatprep.subr.mxu0 0.0
    %2088 = vmatpush1.msra.mxu0 %v2050
    %2089 = vmatprep.subr.mxu0 0.0
    %2090 = vmatpush1.msra.mxu0 %v2051
    %2091 = vmatprep.subr.mxu0 0.0
    %2092 = vmatpush1.msra.mxu0 0.0
    %2093 = vmatprep.subr.mxu0 0.0
    %2094 = vmatpush1.msra.mxu0 0.0
    %2095 = vmatprep.subr.mxu0 0.0
    %2096 = vmatpush1.msra.mxu0 0.0
    %2097 = vmatprep.subr.mxu0 0.0
    %2098 = vmatpush1.msra.mxu0 0.0
    %2099 = vmatprep.subr.mxu0 0.0
    %2100 = vmatpush1.msra.mxu0 0.0
    %2101 = vmatprep.subr.mxu0 0.0
    %2102 = vmatpush1.msra.mxu0 0.0
    %2103 = vmatprep.subr.mxu0 0.0
    %2104 = vmatpush1.msra.mxu0 0.0
    %2105 = vmatprep.subr.mxu0 0.0
    %2106 = vmatpush1.msra.mxu0 0.0
    %2107 = vmatprep.subr.mxu0 0.0
    %2108 = vmatpush1.msra.mxu0 0.0
    %2109 = vmatprep.subr.mxu0 0.0
    %2110 = vmatpush1.msra.mxu0 0.0
    %2111 = vmatprep.subr.mxu0 0.0
    %2112 = vmatpush1.msra.mxu0 0.0
    %2113 = vmatprep.subr.mxu0 0.0
    %2114 = vmatpush1.msra.mxu0 0.0
    %2115 = vmatprep.subr.mxu0 0.0
    %2116 = vmatpush1.msra.mxu0 0.0
    %2117 = vmatprep.subr.mxu0 0.0
    %2118 = vmatpush1.msra.mxu0 0.0
    %2119 = vmatprep.subr.mxu0 0.0
    %2120 = vmatpush1.msra.mxu0 0.0
    %2121 = vmatprep.subr.mxu0 0.0
    %2122 = vmatpush1.msra.mxu0 0.0
    %2123 = vmatprep.mubr.f32.mxu0 0.0
    %2124 = vmatmul.mubr.f32.gmra.mrb[0].mxu0 %v2035
    %v2125 = vpop.f32.mrb[0].mxu0
    %v2126 = vadd.f32 %v2057, %v2125
    %v2127 = vpop.f32.mrb[0].mxu0
    %2128 = vdwg.mxu0
    %2129 = vmax.xlane.f32.xlu0 %v2126
    %v2130 = vpop.xlane.xlu0 %2129
    %v2131 = vsub.f32 %v2126, %v2130
    %v2132 = vmul.f32 %v2131, 1.442695
    %v2133 = vpow.pop %v2132
    %2134 = vadd.xlane.f32.xlu0 %v2133
    %v2135 = vpop.xlane.xlu0 %2134
    %v2136 = vlog2.pop %v2135
    %v2137 = vmul.f32 %v2136, 0.6931472
    %v2138 = vsub.f32 %v2131, %v2137
    %2139 = vst [vmem:[#allocation14] sm:$0xff] %v2138
    // Predicated region
    $region50: #{tpu_custom_call.1} parent=1 // pred_check
      _
    $region51: #{tpu_custom_call.1} parent=1 // pred_check_branch
      %2141 = sbr.rel (0) target = $region53
    $region52: #{tpu_custom_call.1} parent=1 // pred_region
      %s2143 = ssub.s32 128, 128
      %2144 = vsyncadd [#allocation6], %s2143
      %s2146 = sshll.u32 [#allocation14], 4
      %s2147 = int_to_ptr.vmem [resolvable:$true] %s2146
      %2149 = dma.vmem_to_hbm [thread:$0]  %s2147, 128, %s7, [#allocation6]
    $region53: #{tpu_custom_call.1} parent=1 // pred_fallthru
      _
    // Predicated region
    $region54: #{tpu_custom_call.1} parent=1 // pred_check
      _
    $region55: #{tpu_custom_call.1} parent=1 // pred_check_branch
      %2151 = sbr.rel (0) target = $region57
    $region56: #{tpu_custom_call.1} parent=1 // pred_region
      %2152 = dma.done [#allocation6], 128
    $region57: #{tpu_custom_call.1} parent=1 // pred_fallthru
      _
    %2153 = vsyncpa [#allocation5], 1
    %2154 = vsyncpa [#allocation10], 1
    %2155 = vsyncpa [#allocation13], 1
    %2156 = vsyncpa [#allocation6], 1
    %2157 = vsyncpa [#allocation7], 1

</llo_original>
